<compile_context>
chip_gen: v7x
topology: tpu7x:2x2x1
jax: 0.10.0
libtpu: 0.0.40
codegen_flags: <defaults>
</compile_context>

<pallas_src>
import math
import functools
import numpy as np

import jax
import jax.numpy as jnp
from jax.experimental import pallas as pl
from jax.experimental.pallas import tpu as pltpu

LAYER_NORM_EPS = 1e-5
NEG_INF = -1e20  # neginf(float32) in the reference code


def _layer_norm(x, gamma, beta):
    mu = jnp.mean(x, axis=-1, keepdims=True)
    var = jnp.mean((x - mu) ** 2, axis=-1, keepdims=True)
    return (x - mu) * jax.lax.rsqrt(var + LAYER_NORM_EPS) * gamma + beta


def decoder_stack_kernel(x_ref, mask_ref,
                         wqkv_ref, bqkv_ref, wo_ref, bo_ref,
                         g1_ref, be1_ref,
                         w1_ref, b1_ref, w2_ref, b2_ref,
                         g3_ref, be3_ref,
                         o_ref,
                         x_acc_ref, ctx_ref,
                         *, n_heads):
    layer = pl.program_id(1)
    n_layers = pl.num_programs(1)

    # Layer 0: load the embedding block into the resident accumulator.
    @pl.when(layer == 0)
    def _():
        x_acc_ref[...] = x_ref[...]

    x = x_acc_ref[...]                       # (S, D) f32, resident across layers
    S, D = x.shape
    dh = D // n_heads
    inv_scale = 1.0 / math.sqrt(dh)
    bf16, f32 = jnp.bfloat16, jnp.float32

    # ---- fused QKV projection (bf16 operands, f32 accumulation on the MXU) ----
    qkv = jnp.dot(x.astype(bf16), wqkv_ref[...],
                  preferred_element_type=f32) + bqkv_ref[...]
    # q is scaled after bias add, exactly as in the reference (q.div_(scale)).
    q = (qkv[:, 0 * D:1 * D] * inv_scale).astype(bf16)
    k = qkv[:, 1 * D:2 * D].astype(bf16)
    v = qkv[:, 2 * D:3 * D].astype(bf16)

    allow = mask_ref[...] > 0.0              # (S, S) causal mask (True = attend)

    # ---- per-head attention: no explicit transpose, no concatenate ----
    for h in range(n_heads):                 # static unroll; n_heads is small & static
        sl = slice(h * dh, (h + 1) * dh)
        qh, kh, vh = q[:, sl], k[:, sl], v[:, sl]            # (S, dh) bf16
        scores = jax.lax.dot_general(                         # q @ k^T via contraction
            qh, kh, dimension_numbers=(((1,), (1,)), ((), ())),
            preferred_element_type=f32)                       # (S, S) f32
        scores = jnp.where(allow, scores, NEG_INF)
        m = jnp.max(scores, axis=-1, keepdims=True)
        p = jnp.exp(scores - m)                               # f32 softmax
        denom = jnp.sum(p, axis=-1, keepdims=True)
        attn = p * pl.reciprocal(denom, approx=True)          # EUP reciprocal
        ctx_ref[:, sl] = jnp.dot(attn.astype(bf16), vh,
                                 preferred_element_type=f32)

    ctx = ctx_ref[...]                                        # (S, D) f32

    attn_out = jnp.dot(ctx.astype(bf16), wo_ref[...],
                       preferred_element_type=f32) + bo_ref[...]
    # dropout p=0 -> identity
    x = _layer_norm(attn_out + x, g1_ref[...], be1_ref[...])  # norm1

    # ---- FFN ----
    h1 = jnp.dot(x.astype(bf16), w1_ref[...],
                 preferred_element_type=f32) + b1_ref[...]
    h1 = jnp.maximum(h1, 0.0)                                 # relu
    ffn_out = jnp.dot(h1.astype(bf16), w2_ref[...],
                      preferred_element_type=f32) + b2_ref[...]
    x = _layer_norm(x + ffn_out, g3_ref[...], be3_ref[...])   # norm3

    x_acc_ref[...] = x                       # carry to next layer (VMEM resident)

    @pl.when(layer == n_layers - 1)
    def _():
        o_ref[...] = x


_STACK_ORDER_DTYPES = (
    ('wqkv', jnp.bfloat16), ('bqkv', jnp.float32),
    ('wo',   jnp.bfloat16), ('bo',   jnp.float32),
    ('g1',   jnp.float32),  ('be1',  jnp.float32),
    ('w1',   jnp.bfloat16), ('b1',   jnp.float32),
    ('w2',   jnp.bfloat16), ('b2',   jnp.float32),
    ('g3',   jnp.float32),  ('be3',  jnp.float32),
)


def decoder_forward(tokens, tok_emb, pos_emb, layer_params, n_heads,
                    embeddings_scale=True):
    """Full decoder forward. tokens: [B, S] int32 -> [B, S, D] float32."""
    B, S = tokens.shape
    D = tok_emb.shape[1]
    L = len(layer_params)
    F = layer_params[0]['w1'].shape[1]

    # ---- forward_embedding (plain JAX gathers; outside the Pallas kernel) ----
    positions = jnp.arange(S, dtype=jnp.int32)
    x = tok_emb[tokens]
    if embeddings_scale:
        x = x * np.sqrt(D)
    x = (x + pos_emb[positions][None, :, :]).astype(jnp.float32)      # (B, S, D)

    # ---- stack per-layer weights as [L, ...]; matmul weights in bf16 ----
    stacked = [jnp.stack([p[name] for p in layer_params]).astype(dt)
               for name, dt in _STACK_ORDER_DTYPES]

    # causal mask precomputed once (1.0 = allowed); constant BlockSpec -> one DMA
    mask = jnp.asarray(np.tril(np.ones((S, S), np.float32)))

    in_specs = [
        pl.BlockSpec((pl.Squeezed(), S, D), lambda b, l: (b, 0, 0)),   # x (per batch)
        pl.BlockSpec((S, S), lambda b, l: (0, 0)),                     # causal mask
    ]
    for w in stacked:                                                  # per-layer weights
        in_specs.append(pl.BlockSpec((pl.Squeezed(),) + w.shape[1:],
                                     lambda b, l: (l, 0, 0)))

    # ---- explicit VMEM budget (weights double-buffered for layer prefetch) ----
    per_layer_w = sum(w.size * w.dtype.itemsize for w in stacked) // L
    est = (2 * per_layer_w                       # double-buffered layer weights
           + 2 * 2 * S * D * 4                   # x in + out blocks (double-buffered)
           + 2 * S * S * 4                       # mask
           + 2 * S * D * 4                       # x_acc + ctx scratch
           + 4 * (2 * S * S + 3 * S * D + S * F + 8 * S * D))   # live intermediates
    vmem_limit = int(min(max(2 * est, 16 * 2**20), 64 * 2**20))  # <=64MiB fits all chips

    kernel = functools.partial(decoder_stack_kernel, n_heads=n_heads)
    out = pl.pallas_call(
        kernel,
        out_shape=jax.ShapeDtypeStruct((B, S, D), jnp.float32),
        grid=(B, L),
        in_specs=in_specs,
        out_specs=pl.BlockSpec((pl.Squeezed(), S, D), lambda b, l: (b, 0, 0)),
        scratch_shapes=[pltpu.VMEM((S, D), jnp.float32),   # resident activation
                        pltpu.VMEM((S, D), jnp.float32)],  # per-head context
        compiler_params=pltpu.CompilerParams(
            dimension_semantics=("parallel", "arbitrary"),
            vmem_limit_bytes=vmem_limit),
    )(x, mask, *stacked)
    return out


def create_position_codes(n_pos, dim):
    """Sinusoidal position codes, identical to the torch reference."""
    position_enc = np.array(
        [[pos / np.power(10000, 2 * j / dim) for j in range(dim // 2)]
         for pos in range(n_pos)], dtype=np.float64)
    out = np.zeros((n_pos, dim), dtype=np.float32)
    out[:, 0::2] = np.sin(position_enc).astype(np.float32)
    out[:, 1::2] = np.cos(position_enc).astype(np.float32)
    return jnp.asarray(out)


def init_layer_params(key, D, F):
    ks = jax.random.split(key, 8)

    def xav(k, fan_in, fan_out):
        w = (jax.random.normal(k, (fan_in, fan_out), jnp.float32)
             * math.sqrt(2.0 / (fan_in + fan_out)))
        # Round-trip through bf16 so the kernel's bf16 weights and the f32
        # reference use numerically identical parameter values.
        return w.astype(jnp.bfloat16).astype(jnp.float32)

    wq, wk, wv = xav(ks[0], D, D), xav(ks[1], D, D), xav(ks[2], D, D)
    return {
        'wqkv': jnp.concatenate([wq, wk, wv], axis=1),           # (D, 3D) fused
        'bqkv': jnp.zeros((1, 3 * D), jnp.float32),
        'wo': xav(ks[3], D, D), 'bo': jnp.zeros((1, D), jnp.float32),
        'g1': jnp.ones((1, D), jnp.float32), 'be1': jnp.zeros((1, D), jnp.float32),
        'w1': xav(ks[4], D, F),
        'b1': 0.01 * jax.random.normal(ks[5], (1, F), jnp.float32),
        'w2': xav(ks[6], F, D),
        'b2': 0.01 * jax.random.normal(ks[7], (1, D), jnp.float32),
        'g3': jnp.ones((1, D), jnp.float32), 'be3': jnp.zeros((1, D), jnp.float32),
    }


# ---------------- pure-JAX f32 reference (sanity check of the same math) ----------------
def _ref_layer(x, p, n_heads):
    B, S, D = x.shape
    dh = D // n_heads
    scale = math.sqrt(dh)
    qkv = x @ p['wqkv'] + p['bqkv']
    q, k, v = qkv[..., :D] / scale, qkv[..., D:2 * D], qkv[..., 2 * D:]
    qh = q.reshape(B, S, n_heads, dh).transpose(0, 2, 1, 3)
    kh = k.reshape(B, S, n_heads, dh).transpose(0, 2, 1, 3)
    vh = v.reshape(B, S, n_heads, dh).transpose(0, 2, 1, 3)
    scores = jnp.einsum('bhqd,bhkd->bhqk', qh, kh)
    allow = jnp.tril(jnp.ones((S, S), bool))
    scores = jnp.where(allow[None, None], scores, NEG_INF)
    attn = jax.nn.softmax(scores, axis=-1)
    ctx = jnp.einsum('bhqk,bhkd->bhqd', attn, vh).transpose(0, 2, 1, 3).reshape(B, S, D)
    attn_out = ctx @ p['wo'] + p['bo']
    x = _layer_norm(attn_out + x, p['g1'], p['be1'])
    h1 = jnp.maximum(x @ p['w1'] + p['b1'], 0.0)
    x = _layer_norm(x + (h1 @ p['w2'] + p['b2']), p['g3'], p['be3'])
    return x


if __name__ == "__main__":
    key = jax.random.PRNGKey(0)
    B, S, D, H, F, V, NPOS, L = 2, 8, 32, 2, 64, 50, 16, 2

    k_tok, k_emb, *k_layers = jax.random.split(key, 2 + L)
    tokens = jax.random.randint(k_tok, (B, S), 0, V, dtype=jnp.int32)
    tok_emb = 0.02 * jax.random.normal(k_emb, (V, D), jnp.float32)
    pos_emb = create_position_codes(NPOS, D)
    layer_params = [init_layer_params(k, D, F) for k in k_layers]

    out = decoder_forward(tokens, tok_emb, pos_emb, layer_params, n_heads=H)
    out = jax.block_until_ready(out)

    # pure-JAX reference of the same math (f32 everywhere; weights are pre-rounded
    # to the bf16 grid so the only divergence is bf16 activation rounding in-kernel)
    ref = tok_emb[tokens] * np.sqrt(D) + pos_emb[jnp.arange(S)][None, :, :]
    ref = ref.astype(jnp.float32)
    for p in layer_params:
        ref = _ref_layer(ref, p, H)
    ref = jax.block_until_ready(ref)

    assert out.shape == (B, S, D)
    assert bool(jnp.all(jnp.isfinite(out)))
    max_err = float(jnp.max(jnp.abs(out - ref)))
    assert bool(jnp.allclose(out, ref, atol=5e-2, rtol=5e-2)), max_err
    print("KERNEL_OK")
</pallas_src>

<mosaic_0001>
module attributes {stable_mosaic.version = 11 : i64} {
  func.func @decoder_stack_kernel(%arg0: i32, %arg1: i32, %arg2: memref<1x8x32xf32, #tpu.memory_space<vmem>>, %arg3: memref<8x8xf32, #tpu.memory_space<vmem>>, %arg4: memref<1x32x96xbf16, #tpu.memory_space<vmem>>, %arg5: memref<1x1x96xf32, #tpu.memory_space<vmem>>, %arg6: memref<1x32x32xbf16, #tpu.memory_space<vmem>>, %arg7: memref<1x1x32xf32, #tpu.memory_space<vmem>>, %arg8: memref<1x1x32xf32, #tpu.memory_space<vmem>>, %arg9: memref<1x1x32xf32, #tpu.memory_space<vmem>>, %arg10: memref<1x32x64xbf16, #tpu.memory_space<vmem>>, %arg11: memref<1x1x64xf32, #tpu.memory_space<vmem>>, %arg12: memref<1x64x32xbf16, #tpu.memory_space<vmem>>, %arg13: memref<1x1x32xf32, #tpu.memory_space<vmem>>, %arg14: memref<1x1x32xf32, #tpu.memory_space<vmem>>, %arg15: memref<1x1x32xf32, #tpu.memory_space<vmem>>, %arg16: memref<1x8x32xf32, #tpu.memory_space<vmem>>, %arg17: memref<8x32xf32, #tpu.memory_space<vmem>>, %arg18: memref<8x32xf32, #tpu.memory_space<vmem>>) attributes {dimension_semantics = [#tpu.dimension_semantics<parallel>, #tpu.dimension_semantics<arbitrary>], iteration_bounds = array<i64: 2, 2>, scalar_prefetch = 0 : i64, scratch_operands = 2 : i64, tpu.core_type = #tpu.core_type<tc>, window_params = [{transform_indices = @transform_0, window_bounds = array<i64: 1, 8, 32>}, {pipeline_mode = #tpu.pipeline_mode<synchronous>, transform_indices = @transform_1, window_bounds = array<i64: 8, 8>}, {transform_indices = @transform_2, window_bounds = array<i64: 1, 32, 96>}, {transform_indices = @transform_3, window_bounds = array<i64: 1, 1, 96>}, {transform_indices = @transform_4, window_bounds = array<i64: 1, 32, 32>}, {transform_indices = @transform_5, window_bounds = array<i64: 1, 1, 32>}, {transform_indices = @transform_6, window_bounds = array<i64: 1, 1, 32>}, {transform_indices = @transform_7, window_bounds = array<i64: 1, 1, 32>}, {transform_indices = @transform_8, window_bounds = array<i64: 1, 32, 64>}, {transform_indices = @transform_9, window_bounds = array<i64: 1, 1, 64>}, {transform_indices = @transform_10, window_bounds = array<i64: 1, 64, 32>}, {transform_indices = @transform_11, window_bounds = array<i64: 1, 1, 32>}, {transform_indices = @transform_12, window_bounds = array<i64: 1, 1, 32>}, {transform_indices = @transform_13, window_bounds = array<i64: 1, 1, 32>}, {transform_indices = @transform_14, window_bounds = array<i64: 1, 8, 32>}]} {
    %c0_i32 = arith.constant 0 : i32
    %0 = arith.cmpi eq, %arg1, %c0_i32 : i32
    %1 = arith.extui %0 : i1 to i32
    %c0_i32_0 = arith.constant 0 : i32
    %2 = arith.cmpi ne, %1, %c0_i32_0 : i32
    scf.if %2 {
      %c0_74 = arith.constant 0 : index
      %c0_75 = arith.constant 0 : index
      %c0_76 = arith.constant 0 : index
      %146 = vector.load %arg2[%c0_74, %c0_75, %c0_76] : memref<1x8x32xf32, #tpu.memory_space<vmem>>, vector<1x8x32xf32>
      %147 = vector.shape_cast %146 : vector<1x8x32xf32> to vector<8x32xf32>
      %c0_77 = arith.constant 0 : index
      %c0_78 = arith.constant 0 : index
      %148 = vector.load %arg17[%c0_77, %c0_78] : memref<8x32xf32, #tpu.memory_space<vmem>>, vector<8x32xf32>
      tpu.vector_store %arg17[%c0_77, %c0_78], %147 {strides = array<i32>} : memref<8x32xf32, #tpu.memory_space<vmem>>, vector<8x32xf32>,
    } else {
    }
    %c0 = arith.constant 0 : index
    %c0_1 = arith.constant 0 : index
    %3 = vector.load %arg17[%c0, %c0_1] : memref<8x32xf32, #tpu.memory_space<vmem>>, vector<8x32xf32>
    %4 = arith.truncf %3 : vector<8x32xf32> to vector<8x32xbf16>
    %c0_2 = arith.constant 0 : index
    %c0_3 = arith.constant 0 : index
    %c0_4 = arith.constant 0 : index
    %5 = vector.load %arg4[%c0_2, %c0_3, %c0_4] : memref<1x32x96xbf16, #tpu.memory_space<vmem>>, vector<1x32x96xbf16>
    %6 = vector.shape_cast %5 : vector<1x32x96xbf16> to vector<32x96xbf16>
    %cst = arith.constant dense<0.000000e+00> : vector<8x96xf32>
    %7 = tpu.matmul %4, %6, %cst {dimension_numbers = #tpu.dot_dimension_numbers<[1], [0], [0], [1], [0, 0, 1, 1], [], []>} : vector<8x32xbf16>, vector<32x96xbf16>, vector<8x96xf32> -> vector<8x96xf32>
    %c0_5 = arith.constant 0 : index
    %c0_6 = arith.constant 0 : index
    %c0_7 = arith.constant 0 : index
    %8 = vector.load %arg5[%c0_5, %c0_6, %c0_7] : memref<1x1x96xf32, #tpu.memory_space<vmem>>, vector<1x1x96xf32>
    %9 = vector.shape_cast %8 : vector<1x1x96xf32> to vector<1x96xf32>
    %10 = vector.broadcast %9 : vector<1x96xf32> to vector<8x96xf32>
    %11 = arith.addf %7, %10 : vector<8x96xf32>
    %12 = vector.extract_strided_slice %11 {offsets = [0, 0], sizes = [8, 32], strides = [1, 1]} : vector<8x96xf32> to vector<8x32xf32>
    %cst_8 = arith.constant 2.500000e-01 : f32
    %13 = vector.broadcast %cst_8 : f32 to vector<8x32xf32>
    %14 = arith.mulf %12, %13 : vector<8x32xf32>
    %15 = arith.truncf %14 : vector<8x32xf32> to vector<8x32xbf16>
    %16 = vector.extract_strided_slice %11 {offsets = [0, 32], sizes = [8, 32], strides = [1, 1]} : vector<8x96xf32> to vector<8x32xf32>
    %17 = arith.truncf %16 : vector<8x32xf32> to vector<8x32xbf16>
    %18 = vector.extract_strided_slice %11 {offsets = [0, 64], sizes = [8, 32], strides = [1, 1]} : vector<8x96xf32> to vector<8x32xf32>
    %19 = arith.truncf %18 : vector<8x32xf32> to vector<8x32xbf16>
    %c0_9 = arith.constant 0 : index
    %c0_10 = arith.constant 0 : index
    %20 = vector.load %arg3[%c0_9, %c0_10] : memref<8x8xf32, #tpu.memory_space<vmem>>, vector<8x8xf32>
    %cst_11 = arith.constant 0.000000e+00 : f32
    %21 = vector.broadcast %cst_11 : f32 to vector<8x8xf32>
    %22 = arith.cmpf ogt, %20, %21 : vector<8x8xf32>
    %23 = vector.extract_strided_slice %15 {offsets = [0, 0], sizes = [8, 16], strides = [1, 1]} : vector<8x32xbf16> to vector<8x16xbf16>
    %24 = vector.extract_strided_slice %17 {offsets = [0, 0], sizes = [8, 16], strides = [1, 1]} : vector<8x32xbf16> to vector<8x16xbf16>
    %25 = vector.extract_strided_slice %19 {offsets = [0, 0], sizes = [8, 16], strides = [1, 1]} : vector<8x32xbf16> to vector<8x16xbf16>
    %cst_12 = arith.constant dense<0.000000e+00> : vector<8x8xf32>
    %26 = tpu.matmul %23, %24, %cst_12 {dimension_numbers = #tpu.dot_dimension_numbers<[1], [1], [0], [0], [0, 0, 1, 0], [], []>} : vector<8x16xbf16>, vector<8x16xbf16>, vector<8x8xf32> -> vector<8x8xf32>
    %cst_13 = arith.constant -1.000000e+20 : f32
    %27 = vector.broadcast %cst_13 : f32 to vector<8x8xf32>
    %28 = arith.select %22, %26, %27 : vector<8x8xi1>, vector<8x8xf32>
    %cst_14 = arith.constant dense<0xFF800000> : vector<8xf32>
    %29 = vector.multi_reduction <maximumf>, %28, %cst_14 [1] : vector<8x8xf32> to vector<8xf32>
    %30 = vector.shape_cast %29 : vector<8xf32> to vector<8x1xf32>
    %31 = vector.broadcast %30 : vector<8x1xf32> to vector<8x8xf32>
    %32 = arith.subf %28, %31 : vector<8x8xf32>
    %33 = math.exp %32 : vector<8x8xf32>
    %cst_15 = arith.constant dense<0.000000e+00> : vector<8xf32>
    %34 = vector.multi_reduction <add>, %33, %cst_15 [1] : vector<8x8xf32> to vector<8xf32>
    %35 = vector.shape_cast %34 : vector<8xf32> to vector<8x1xf32>
    %36 = tpu.reciprocal %35 {approx = true} : vector<8x1xf32> -> vector<8x1xf32>
    %37 = vector.broadcast %36 : vector<8x1xf32> to vector<8x8xf32>
    %38 = arith.mulf %33, %37 : vector<8x8xf32>
    %39 = arith.truncf %38 : vector<8x8xf32> to vector<8x8xbf16>
    %cst_16 = arith.constant dense<0.000000e+00> : vector<8x16xf32>
    %40 = tpu.matmul %39, %25, %cst_16 {dimension_numbers = #tpu.dot_dimension_numbers<[1], [0], [0], [1], [0, 0, 1, 1], [], []>} : vector<8x8xbf16>, vector<8x16xbf16>, vector<8x16xf32> -> vector<8x16xf32>
    %c0_17 = arith.constant 0 : index
    %c0_18 = arith.constant 0 : index
    %41 = vector.load %arg18[%c0_17, %c0_18] : memref<8x32xf32, #tpu.memory_space<vmem>>, vector<8x16xf32>
    tpu.vector_store %arg18[%c0_17, %c0_18], %40 {strides = array<i32>} : memref<8x32xf32, #tpu.memory_space<vmem>>, vector<8x16xf32>,
    %42 = vector.extract_strided_slice %15 {offsets = [0, 16], sizes = [8, 16], strides = [1, 1]} : vector<8x32xbf16> to vector<8x16xbf16>
    %43 = vector.extract_strided_slice %17 {offsets = [0, 16], sizes = [8, 16], strides = [1, 1]} : vector<8x32xbf16> to vector<8x16xbf16>
    %44 = vector.extract_strided_slice %19 {offsets = [0, 16], sizes = [8, 16], strides = [1, 1]} : vector<8x32xbf16> to vector<8x16xbf16>
    %cst_19 = arith.constant dense<0.000000e+00> : vector<8x8xf32>
    %45 = tpu.matmul %42, %43, %cst_19 {dimension_numbers = #tpu.dot_dimension_numbers<[1], [1], [0], [0], [0, 0, 1, 0], [], []>} : vector<8x16xbf16>, vector<8x16xbf16>, vector<8x8xf32> -> vector<8x8xf32>
    %cst_20 = arith.constant -1.000000e+20 : f32
    %46 = vector.broadcast %cst_20 : f32 to vector<8x8xf32>
    %47 = arith.select %22, %45, %46 : vector<8x8xi1>, vector<8x8xf32>
    %cst_21 = arith.constant dense<0xFF800000> : vector<8xf32>
    %48 = vector.multi_reduction <maximumf>, %47, %cst_21 [1] : vector<8x8xf32> to vector<8xf32>
    %49 = vector.shape_cast %48 : vector<8xf32> to vector<8x1xf32>
    %50 = vector.broadcast %49 : vector<8x1xf32> to vector<8x8xf32>
    %51 = arith.subf %47, %50 : vector<8x8xf32>
    %52 = math.exp %51 : vector<8x8xf32>
    %cst_22 = arith.constant dense<0.000000e+00> : vector<8xf32>
    %53 = vector.multi_reduction <add>, %52, %cst_22 [1] : vector<8x8xf32> to vector<8xf32>
    %54 = vector.shape_cast %53 : vector<8xf32> to vector<8x1xf32>
    %55 = tpu.reciprocal %54 {approx = true} : vector<8x1xf32> -> vector<8x1xf32>
    %56 = vector.broadcast %55 : vector<8x1xf32> to vector<8x8xf32>
    %57 = arith.mulf %52, %56 : vector<8x8xf32>
    %58 = arith.truncf %57 : vector<8x8xf32> to vector<8x8xbf16>
    %cst_23 = arith.constant dense<0.000000e+00> : vector<8x16xf32>
    %59 = tpu.matmul %58, %44, %cst_23 {dimension_numbers = #tpu.dot_dimension_numbers<[1], [0], [0], [1], [0, 0, 1, 1], [], []>} : vector<8x8xbf16>, vector<8x16xbf16>, vector<8x16xf32> -> vector<8x16xf32>
    %c0_24 = arith.constant 0 : index
    %c16 = arith.constant 16 : index
    %60 = vector.load %arg18[%c0_24, %c16] : memref<8x32xf32, #tpu.memory_space<vmem>>, vector<8x16xf32>
    tpu.vector_store %arg18[%c0_24, %c16], %59 {strides = array<i32>} : memref<8x32xf32, #tpu.memory_space<vmem>>, vector<8x16xf32>,
    %c0_25 = arith.constant 0 : index
    %c0_26 = arith.constant 0 : index
    %61 = vector.load %arg18[%c0_25, %c0_26] : memref<8x32xf32, #tpu.memory_space<vmem>>, vector<8x32xf32>
    %62 = arith.truncf %61 : vector<8x32xf32> to vector<8x32xbf16>
    %c0_27 = arith.constant 0 : index
    %c0_28 = arith.constant 0 : index
    %c0_29 = arith.constant 0 : index
    %63 = vector.load %arg6[%c0_27, %c0_28, %c0_29] : memref<1x32x32xbf16, #tpu.memory_space<vmem>>, vector<1x32x32xbf16>
    %64 = vector.shape_cast %63 : vector<1x32x32xbf16> to vector<32x32xbf16>
    %cst_30 = arith.constant dense<0.000000e+00> : vector<8x32xf32>
    %65 = tpu.matmul %62, %64, %cst_30 {dimension_numbers = #tpu.dot_dimension_numbers<[1], [0], [0], [1], [0, 0, 1, 1], [], []>} : vector<8x32xbf16>, vector<32x32xbf16>, vector<8x32xf32> -> vector<8x32xf32>
    %c0_31 = arith.constant 0 : index
    %c0_32 = arith.constant 0 : index
    %c0_33 = arith.constant 0 : index
    %66 = vector.load %arg7[%c0_31, %c0_32, %c0_33] : memref<1x1x32xf32, #tpu.memory_space<vmem>>, vector<1x1x32xf32>
    %67 = vector.shape_cast %66 : vector<1x1x32xf32> to vector<1x32xf32>
    %68 = vector.broadcast %67 : vector<1x32xf32> to vector<8x32xf32>
    %69 = arith.addf %65, %68 : vector<8x32xf32>
    %70 = arith.addf %69, %3 : vector<8x32xf32>
    %c0_34 = arith.constant 0 : index
    %c0_35 = arith.constant 0 : index
    %c0_36 = arith.constant 0 : index
    %71 = vector.load %arg8[%c0_34, %c0_35, %c0_36] : memref<1x1x32xf32, #tpu.memory_space<vmem>>, vector<1x1x32xf32>
    %72 = vector.shape_cast %71 : vector<1x1x32xf32> to vector<1x32xf32>
    %c0_37 = arith.constant 0 : index
    %c0_38 = arith.constant 0 : index
    %c0_39 = arith.constant 0 : index
    %73 = vector.load %arg9[%c0_37, %c0_38, %c0_39] : memref<1x1x32xf32, #tpu.memory_space<vmem>>, vector<1x1x32xf32>
    %74 = vector.shape_cast %73 : vector<1x1x32xf32> to vector<1x32xf32>
    %cst_40 = arith.constant dense<0.000000e+00> : vector<8xf32>
    %75 = vector.multi_reduction <add>, %70, %cst_40 [1] : vector<8x32xf32> to vector<8xf32>
    %76 = vector.shape_cast %75 : vector<8xf32> to vector<8x1xf32>
    %cst_41 = arith.constant 3.200000e+01 : f32
    %77 = vector.broadcast %cst_41 : f32 to vector<8x1xf32>
    %78 = arith.divf %76, %77 : vector<8x1xf32>
    %79 = vector.broadcast %78 : vector<8x1xf32> to vector<8x32xf32>
    %80 = arith.subf %70, %79 : vector<8x32xf32>
    %81 = arith.mulf %80, %80 : vector<8x32xf32>
    %cst_42 = arith.constant dense<0.000000e+00> : vector<8xf32>
    %82 = vector.multi_reduction <add>, %81, %cst_42 [1] : vector<8x32xf32> to vector<8xf32>
    %83 = vector.shape_cast %82 : vector<8xf32> to vector<8x1xf32>
    %cst_43 = arith.constant 3.200000e+01 : f32
    %84 = vector.broadcast %cst_43 : f32 to vector<8x1xf32>
    %85 = arith.divf %83, %84 : vector<8x1xf32>
    %86 = vector.broadcast %78 : vector<8x1xf32> to vector<8x32xf32>
    %87 = arith.subf %70, %86 : vector<8x32xf32>
    %cst_44 = arith.constant 9.99999974E-6 : f32
    %88 = vector.broadcast %cst_44 : f32 to vector<8x1xf32>
    %89 = arith.addf %85, %88 : vector<8x1xf32>
    %90 = math.rsqrt %89 : vector<8x1xf32>
    %91 = vector.broadcast %90 : vector<8x1xf32> to vector<8x32xf32>
    %92 = arith.mulf %87, %91 : vector<8x32xf32>
    %93 = vector.broadcast %72 : vector<1x32xf32> to vector<8x32xf32>
    %94 = arith.mulf %92, %93 : vector<8x32xf32>
    %95 = vector.broadcast %74 : vector<1x32xf32> to vector<8x32xf32>
    %96 = arith.addf %94, %95 : vector<8x32xf32>
    %97 = arith.truncf %96 : vector<8x32xf32> to vector<8x32xbf16>
    %c0_45 = arith.constant 0 : index
    %c0_46 = arith.constant 0 : index
    %c0_47 = arith.constant 0 : index
    %98 = vector.load %arg10[%c0_45, %c0_46, %c0_47] : memref<1x32x64xbf16, #tpu.memory_space<vmem>>, vector<1x32x64xbf16>
    %99 = vector.shape_cast %98 : vector<1x32x64xbf16> to vector<32x64xbf16>
    %cst_48 = arith.constant dense<0.000000e+00> : vector<8x64xf32>
    %100 = tpu.matmul %97, %99, %cst_48 {dimension_numbers = #tpu.dot_dimension_numbers<[1], [0], [0], [1], [0, 0, 1, 1], [], []>} : vector<8x32xbf16>, vector<32x64xbf16>, vector<8x64xf32> -> vector<8x64xf32>
    %c0_49 = arith.constant 0 : index
    %c0_50 = arith.constant 0 : index
    %c0_51 = arith.constant 0 : index
    %101 = vector.load %arg11[%c0_49, %c0_50, %c0_51] : memref<1x1x64xf32, #tpu.memory_space<vmem>>, vector<1x1x64xf32>
    %102 = vector.shape_cast %101 : vector<1x1x64xf32> to vector<1x64xf32>
    %103 = vector.broadcast %102 : vector<1x64xf32> to vector<8x64xf32>
    %104 = arith.addf %100, %103 : vector<8x64xf32>
    %cst_52 = arith.constant 0.000000e+00 : f32
    %105 = vector.broadcast %cst_52 : f32 to vector<8x64xf32>
    %106 = arith.maximumf %104, %105 : vector<8x64xf32>
    %107 = arith.truncf %106 : vector<8x64xf32> to vector<8x64xbf16>
    %c0_53 = arith.constant 0 : index
    %c0_54 = arith.constant 0 : index
    %c0_55 = arith.constant 0 : index
    %108 = vector.load %arg12[%c0_53, %c0_54, %c0_55] : memref<1x64x32xbf16, #tpu.memory_space<vmem>>, vector<1x64x32xbf16>
    %109 = vector.shape_cast %108 : vector<1x64x32xbf16> to vector<64x32xbf16>
    %cst_56 = arith.constant dense<0.000000e+00> : vector<8x32xf32>
    %110 = tpu.matmul %107, %109, %cst_56 {dimension_numbers = #tpu.dot_dimension_numbers<[1], [0], [0], [1], [0, 0, 1, 1], [], []>} : vector<8x64xbf16>, vector<64x32xbf16>, vector<8x32xf32> -> vector<8x32xf32>
    %c0_57 = arith.constant 0 : index
    %c0_58 = arith.constant 0 : index
    %c0_59 = arith.constant 0 : index
    %111 = vector.load %arg13[%c0_57, %c0_58, %c0_59] : memref<1x1x32xf32, #tpu.memory_space<vmem>>, vector<1x1x32xf32>
    %112 = vector.shape_cast %111 : vector<1x1x32xf32> to vector<1x32xf32>
    %113 = vector.broadcast %112 : vector<1x32xf32> to vector<8x32xf32>
    %114 = arith.addf %110, %113 : vector<8x32xf32>
    %115 = arith.addf %96, %114 : vector<8x32xf32>
    %c0_60 = arith.constant 0 : index
    %c0_61 = arith.constant 0 : index
    %c0_62 = arith.constant 0 : index
    %116 = vector.load %arg14[%c0_60, %c0_61, %c0_62] : memref<1x1x32xf32, #tpu.memory_space<vmem>>, vector<1x1x32xf32>
    %117 = vector.shape_cast %116 : vector<1x1x32xf32> to vector<1x32xf32>
    %c0_63 = arith.constant 0 : index
    %c0_64 = arith.constant 0 : index
    %c0_65 = arith.constant 0 : index
    %118 = vector.load %arg15[%c0_63, %c0_64, %c0_65] : memref<1x1x32xf32, #tpu.memory_space<vmem>>, vector<1x1x32xf32>
    %119 = vector.shape_cast %118 : vector<1x1x32xf32> to vector<1x32xf32>
    %cst_66 = arith.constant dense<0.000000e+00> : vector<8xf32>
    %120 = vector.multi_reduction <add>, %115, %cst_66 [1] : vector<8x32xf32> to vector<8xf32>
    %121 = vector.shape_cast %120 : vector<8xf32> to vector<8x1xf32>
    %cst_67 = arith.constant 3.200000e+01 : f32
    %122 = vector.broadcast %cst_67 : f32 to vector<8x1xf32>
    %123 = arith.divf %121, %122 : vector<8x1xf32>
    %124 = vector.broadcast %123 : vector<8x1xf32> to vector<8x32xf32>
    %125 = arith.subf %115, %124 : vector<8x32xf32>
    %126 = arith.mulf %125, %125 : vector<8x32xf32>
    %cst_68 = arith.constant dense<0.000000e+00> : vector<8xf32>
    %127 = vector.multi_reduction <add>, %126, %cst_68 [1] : vector<8x32xf32> to vector<8xf32>
    %128 = vector.shape_cast %127 : vector<8xf32> to vector<8x1xf32>
    %cst_69 = arith.constant 3.200000e+01 : f32
    %129 = vector.broadcast %cst_69 : f32 to vector<8x1xf32>
    %130 = arith.divf %128, %129 : vector<8x1xf32>
    %131 = vector.broadcast %123 : vector<8x1xf32> to vector<8x32xf32>
    %132 = arith.subf %115, %131 : vector<8x32xf32>
    %cst_70 = arith.constant 9.99999974E-6 : f32
    %133 = vector.broadcast %cst_70 : f32 to vector<8x1xf32>
    %134 = arith.addf %130, %133 : vector<8x1xf32>
    %135 = math.rsqrt %134 : vector<8x1xf32>
    %136 = vector.broadcast %135 : vector<8x1xf32> to vector<8x32xf32>
    %137 = arith.mulf %132, %136 : vector<8x32xf32>
    %138 = vector.broadcast %117 : vector<1x32xf32> to vector<8x32xf32>
    %139 = arith.mulf %137, %138 : vector<8x32xf32>
    %140 = vector.broadcast %119 : vector<1x32xf32> to vector<8x32xf32>
    %141 = arith.addf %139, %140 : vector<8x32xf32>
    %c0_71 = arith.constant 0 : index
    %c0_72 = arith.constant 0 : index
    %142 = vector.load %arg17[%c0_71, %c0_72] : memref<8x32xf32, #tpu.memory_space<vmem>>, vector<8x32xf32>
    tpu.vector_store %arg17[%c0_71, %c0_72], %141 {strides = array<i32>} : memref<8x32xf32, #tpu.memory_space<vmem>>, vector<8x32xf32>,
    %c1_i32 = arith.constant 1 : i32
    %143 = arith.cmpi eq, %arg1, %c1_i32 : i32
    %144 = arith.extui %143 : i1 to i32
    %c0_i32_73 = arith.constant 0 : i32
    %145 = arith.cmpi ne, %144, %c0_i32_73 : i32
    scf.if %145 {
      %c0_74 = arith.constant 0 : index
      %c0_75 = arith.constant 0 : index
      %c0_76 = arith.constant 0 : index
      %146 = vector.load %arg16[%c0_74, %c0_75, %c0_76] : memref<1x8x32xf32, #tpu.memory_space<vmem>>, vector<1x8x32xf32>
      %147 = vector.shape_cast %146 : vector<1x8x32xf32> to vector<8x32xf32>
      %148 = vector.shape_cast %141 : vector<8x32xf32> to vector<1x8x32xf32>
      tpu.vector_store %arg16[%c0_74, %c0_75, %c0_76], %148 {strides = array<i32>} : memref<1x8x32xf32, #tpu.memory_space<vmem>>, vector<1x8x32xf32>,
    } else {
    }
    return
  }
  func.func @transform_0(%arg0: i32, %arg1: i32) -> (i32, i32, i32) {
    %c0_i32 = arith.constant 0 : i32
    %c0_i32_0 = arith.constant 0 : i32
    %c0_i32_1 = arith.constant 0 : i32
    return %arg0, %c0_i32, %c0_i32_0 : i32, i32, i32
  }
  func.func @transform_1(%arg0: i32, %arg1: i32) -> (i32, i32) {
    %c0_i32 = arith.constant 0 : i32
    %c0_i32_0 = arith.constant 0 : i32
    %c0_i32_1 = arith.constant 0 : i32
    return %c0_i32, %c0_i32_0 : i32, i32
  }
  func.func @transform_2(%arg0: i32, %arg1: i32) -> (i32, i32, i32) {
    %c0_i32 = arith.constant 0 : i32
    %c0_i32_0 = arith.constant 0 : i32
    %c0_i32_1 = arith.constant 0 : i32
    return %arg1, %c0_i32, %c0_i32_0 : i32, i32, i32
  }
  func.func @transform_3(%arg0: i32, %arg1: i32) -> (i32, i32, i32) {
    %c0_i32 = arith.constant 0 : i32
    %c0_i32_0 = arith.constant 0 : i32
    %c0_i32_1 = arith.constant 0 : i32
    return %arg1, %c0_i32, %c0_i32_0 : i32, i32, i32
  }
  func.func @transform_4(%arg0: i32, %arg1: i32) -> (i32, i32, i32) {
    %c0_i32 = arith.constant 0 : i32
    %c0_i32_0 = arith.constant 0 : i32
    %c0_i32_1 = arith.constant 0 : i32
    return %arg1, %c0_i32, %c0_i32_0 : i32, i32, i32
  }
  func.func @transform_5(%arg0: i32, %arg1: i32) -> (i32, i32, i32) {
    %c0_i32 = arith.constant 0 : i32
    %c0_i32_0 = arith.constant 0 : i32
    %c0_i32_1 = arith.constant 0 : i32
    return %arg1, %c0_i32, %c0_i32_0 : i32, i32, i32
  }
  func.func @transform_6(%arg0: i32, %arg1: i32) -> (i32, i32, i32) {
    %c0_i32 = arith.constant 0 : i32
    %c0_i32_0 = arith.constant 0 : i32
    %c0_i32_1 = arith.constant 0 : i32
    return %arg1, %c0_i32, %c0_i32_0 : i32, i32, i32
  }
  func.func @transform_7(%arg0: i32, %arg1: i32) -> (i32, i32, i32) {
    %c0_i32 = arith.constant 0 : i32
    %c0_i32_0 = arith.constant 0 : i32
    %c0_i32_1 = arith.constant 0 : i32
    return %arg1, %c0_i32, %c0_i32_0 : i32, i32, i32
  }
  func.func @transform_8(%arg0: i32, %arg1: i32) -> (i32, i32, i32) {
    %c0_i32 = arith.constant 0 : i32
    %c0_i32_0 = arith.constant 0 : i32
    %c0_i32_1 = arith.constant 0 : i32
    return %arg1, %c0_i32, %c0_i32_0 : i32, i32, i32
  }
  func.func @transform_9(%arg0: i32, %arg1: i32) -> (i32, i32, i32) {
    %c0_i32 = arith.constant 0 : i32
    %c0_i32_0 = arith.constant 0 : i32
    %c0_i32_1 = arith.constant 0 : i32
    return %arg1, %c0_i32, %c0_i32_0 : i32, i32, i32
  }
  func.func @transform_10(%arg0: i32, %arg1: i32) -> (i32, i32, i32) {
    %c0_i32 = arith.constant 0 : i32
    %c0_i32_0 = arith.constant 0 : i32
    %c0_i32_1 = arith.constant 0 : i32
    return %arg1, %c0_i32, %c0_i32_0 : i32, i32, i32
  }
  func.func @transform_11(%arg0: i32, %arg1: i32) -> (i32, i32, i32) {
    %c0_i32 = arith.constant 0 : i32
    %c0_i32_0 = arith.constant 0 : i32
    %c0_i32_1 = arith.constant 0 : i32
    return %arg1, %c0_i32, %c0_i32_0 : i32, i32, i32
  }
  func.func @transform_12(%arg0: i32, %arg1: i32) -> (i32, i32, i32) {
    %c0_i32 = arith.constant 0 : i32
    %c0_i32_0 = arith.constant 0 : i32
    %c0_i32_1 = arith.constant 0 : i32
    return %arg1, %c0_i32, %c0_i32_0 : i32, i32, i32
  }
  func.func @transform_13(%arg0: i32, %arg1: i32) -> (i32, i32, i32) {
    %c0_i32 = arith.constant 0 : i32
    %c0_i32_0 = arith.constant 0 : i32
    %c0_i32_1 = arith.constant 0 : i32
    return %arg1, %c0_i32, %c0_i32_0 : i32, i32, i32
  }
  func.func @transform_14(%arg0: i32, %arg1: i32) -> (i32, i32, i32) {
    %c0_i32 = arith.constant 0 : i32
    %c0_i32_0 = arith.constant 0 : i32
    %c0_i32_1 = arith.constant 0 : i32
    return %arg0, %c0_i32, %c0_i32_0 : i32, i32, i32
  }
}

</mosaic_0001>

<llo_original>
// kernel: tpu_custom_call.1
$region0: #{tpu_custom_call.1}
  #allocation0 [shape = 'u32[]', space=smem, size = 0x4, offset = 0x4, fixed_abs, tag = 'smem constant byte address 0x4 - core index']
  #allocation1 [shape = 'u32[144,128]{1,0:T(1,128)}', space=vmem, size = 0x12000, scoped, tag = 'internal scratch']
  #allocation2 [shape = 'f32[8,32]{1,0:T(8,128)}', space=vmem, size = 0x1000, scoped, tag = 'scratch operand']
  #allocation3 [shape = 'f32[8,32]{1,0:T(8,128)}', space=vmem, size = 0x1000, scoped, tag = 'scratch operand']
  %s0 = inlined_call_operand.hbm [shape: f32[2,8,32], index: 0, kind: input, shape index: {}]
  %s1 = inlined_call_operand.hbm [shape: f32[8,8], index: 1, kind: input, shape index: {}]
  %s2 = inlined_call_operand.vmem [shape: bf16[2,32,96], index: 2, kind: input, shape index: {}]
  %s3 = inlined_call_operand.vmem [shape: f32[2,1,96], index: 3, kind: input, shape index: {}]
  %s4 = inlined_call_operand.vmem [shape: bf16[2,32,32], index: 4, kind: input, shape index: {}]
  %s5 = inlined_call_operand.vmem [shape: f32[2,1,32], index: 5, kind: input, shape index: {}]
  %s6 = inlined_call_operand.hbm [shape: f32[2,1,32], index: 6, kind: input, shape index: {}]
  %s7 = inlined_call_operand.hbm [shape: f32[2,1,32], index: 7, kind: input, shape index: {}]
  %s8 = inlined_call_operand.vmem [shape: bf16[2,32,64], index: 8, kind: input, shape index: {}]
  %s9 = inlined_call_operand.hbm [shape: f32[2,1,64], index: 9, kind: input, shape index: {}]
  %s10 = inlined_call_operand.vmem [shape: bf16[2,64,32], index: 10, kind: input, shape index: {}]
  %s11 = inlined_call_operand.vmem [shape: f32[2,1,32], index: 11, kind: input, shape index: {}]
  %s12 = inlined_call_operand.vmem [shape: f32[2,1,32], index: 12, kind: input, shape index: {}]
  %s13 = inlined_call_operand.vmem [shape: f32[2,1,32], index: 13, kind: input, shape index: {}]
  %s14 = inlined_call_operand.hbm [shape: f32[2,8,32], index: 14, kind: output, shape index: {}]
  %s15 = sld [smem:[#allocation0]]
  $region117: #{tpu_custom_call.1} parent=0
    _
  %s17 = ssub.s32 1, %s15
  %s18 = scalar_select 0, %s17, %s15
  $region1: #{tpu_custom_call.1} parent=0
    #allocation4 [shape = 'u8[8192]{0}', space=vmem, size = 0x2000, scoped, tag = 'input window, operand 0']
    #allocation5 [shape = 's32[2]{0}', space=sflag, size = 0x8, scoped, tag = 'scoped memory for tpu_custom_call.1']
    #allocation6 [shape = 's32[2]{0}', space=sflag, size = 0x8, scoped, tag = 'scoped memory for tpu_custom_call.1']
    #allocation7 [shape = 'u8[4096]{0}', space=vmem, size = 0x1000, scoped, tag = 'input window, operand 1, single buffered']
    #allocation8 [shape = 's32[1]{0}', space=sflag, size = 0x4, scoped, tag = 'scoped memory for tpu_custom_call.1']
    #allocation9 [shape = 'u8[1024]{0}', space=vmem, size = 0x400, scoped, tag = 'input window, operand 6']
    #allocation10 [shape = 'u8[1024]{0}', space=vmem, size = 0x400, scoped, tag = 'input window, operand 7']
    #allocation11 [shape = 'u8[1024]{0}', space=vmem, size = 0x400, scoped, tag = 'input window, operand 9']
    #allocation12 [shape = 'u8[8192]{0}', space=vmem, size = 0x2000, scoped, tag = 'output window, operand 0']
    %19 = vsyncpa [#allocation5], 0
    %s20 = scalar_lea.sflag [#allocation5], 1
    %21 = vsyncpa %s20, 0
    %22 = vsyncpa [#allocation8], 0
    %23 = vsyncpa [#allocation6], 0
    %s24 = scalar_lea.sflag [#allocation6], 1
    %25 = vsyncpa %s24, 0
    loop: start=0, step=1, limit=6
    $region2: #{tpu_custom_call.1} parent=1 // loop_pre_header
      _
    $region3: #{tpu_custom_call.1} parent=1 // loop_header
      %s27 = sphi 0, %s31
      %p28 = scmp.ge.s32.totalorder %s27, 6
      %s34 = sphi 0, %s46
      %s35 = sphi 0, %s42
      %s36 = sphi 0, %s34
      %s37 = sphi 0, %s35
      %s38 = sphi 0, %s36
      %s39 = sphi 0, %s37
      %s49 = sphi 0, %s51
      %s52 = sphi 0, %s49
      %s53 = sphi 0, %s52
      %s69 = sphi 0, %s53
      %s73 = sphi 0, %s73
      %s75 = sphi 0, %s73
      %s76 = sphi 0, %s75
      %s90 = sphi 0, %s76
      %s96 = sphi 0, %s98
      %s99 = sphi 0, %s96
      %s100 = sphi 0, %s99
      %s116 = sphi 0, %s100
      %s122 = sphi 0, %s124
      %s125 = sphi 0, %s122
      %s126 = sphi 0, %s125
      %s142 = sphi 0, %s126
      %s148 = sphi 0, %s150
      %s151 = sphi 0, %s148
      %s152 = sphi 0, %s151
      %s168 = sphi 0, %s152
      %s174 = sphi 0, %s176
      %s177 = sphi 0, %s174
      %s178 = sphi 0, %s177
      %s194 = sphi 0, %s178
      %s200 = sphi 0, %s202
      %s203 = sphi 0, %s200
      %s204 = sphi 0, %s203
      %s220 = sphi 0, %s204
      %s226 = sphi 0, %s228
      %s229 = sphi 0, %s226
      %s230 = sphi 0, %s229
      %s246 = sphi 0, %s230
      %s252 = sphi 0, %s254
      %s255 = sphi 0, %s252
      %s256 = sphi 0, %s255
      %s272 = sphi 0, %s256
      %s278 = sphi 0, %s280
      %s281 = sphi 0, %s278
      %s282 = sphi 0, %s281
      %s298 = sphi 0, %s282
      %s304 = sphi 0, %s306
      %s307 = sphi 0, %s304
      %s308 = sphi 0, %s307
      %s324 = sphi 0, %s308
      %s330 = sphi 0, %s332
      %s333 = sphi 0, %s330
      %s334 = sphi 0, %s333
      %s350 = sphi 0, %s334
      %s356 = sphi 0, %s358
      %s359 = sphi 0, %s356
      %s360 = sphi 0, %s359
      %s376 = sphi 0, %s360
      %s382 = sphi 0, %s384
      %s385 = sphi 0, %s382
      %s386 = sphi 0, %s385
      %s402 = sphi 0, %s386
      %s408 = sphi 0, %s410
      %s411 = sphi 0, %s408
      %s412 = sphi 0, %s411
      %s428 = sphi 0, %s412
    $region4: #{tpu_custom_call.1} parent=1 // loop_header_branch
      %30 = sbr.rel (%p28) target = $region8
    $region5: #{tpu_custom_call.1} parent=1 // loop_body
      %s32 = ssub.s32 %s27, 1
      %s33 = ssub.s32 %s27, 2
      %s40 = sadd.s32 1, %s35
      %p41 = scmp.ge.s32.totalorder %s40, 2
      %s42 = scalar_select %p41, 0, %s40
      %s43 = sadd.s32 1, %s34
      %s44 = scalar_select %p41, %s43, %s34
      %p45 = scmp.ge.s32.totalorder %s44, 2
      %s46 = scalar_select %p45, 0, %s44
      %s47 = ssub.s32 %s34, %s46
      %p48 = scmp.eq.s32.totalorder %s47, 0
      %s50 = sadd.s32 %s49, 1
      %s51 = scalar_select %p48, %s49, %s50
      %p54 = pneg %p48
      %p55 = scmp.eq.s32.totalorder %s27, 3
      %p56 = por %p54, %p55
      %p57 = scmp.ne.s32.totalorder %s49, %s52
      %p58 = scmp.eq.s32.totalorder %s27, 0
      %p59 = por %p57, %p58
      %p60 = scmp.ne.s32.totalorder %s49, %s52
      %p61 = scmp.eq.s32.totalorder %s32, 3
      %p62 = por %p60, %p61
      %p63 = scmp.ne.s32.totalorder %s52, %s53
      %p64 = scmp.eq.s32.totalorder %s32, 0
      %p65 = por %p63, %p64
      %p66 = scmp.ne.s32.totalorder %s52, %s53
      %p67 = scmp.eq.s32.totalorder %s33, 3
      %p68 = por %p66, %p67
      %p70 = scmp.ne.s32.totalorder %s53, %s69
      %p71 = scmp.eq.s32.totalorder %s33, 0
      %p72 = por %p70, %p71
      %s74 = sadd.s32 %s73, 1
      %p77 = scmp.eq.s32.totalorder %s27, 3
      %p78 = scmp.ne.s32.totalorder %s73, %s75
      %p79 = scmp.eq.s32.totalorder %s27, 0
      %p80 = por %p78, %p79
      %p81 = scmp.ne.s32.totalorder %s73, %s75
      %p82 = scmp.eq.s32.totalorder %s32, 3
      %p83 = por %p81, %p82
      %p84 = scmp.ne.s32.totalorder %s75, %s76
      %p85 = scmp.eq.s32.totalorder %s32, 0
      %p86 = por %p84, %p85
      %p87 = scmp.ne.s32.totalorder %s75, %s76
      %p88 = scmp.eq.s32.totalorder %s33, 3
      %p89 = por %p87, %p88
      %p91 = scmp.ne.s32.totalorder %s76, %s90
      %p92 = scmp.eq.s32.totalorder %s33, 0
      %p93 = por %p91, %p92
      %s94 = ssub.s32 %s35, %s42
      %p95 = scmp.eq.s32.totalorder %s94, 0
      %s97 = sadd.s32 %s96, 1
      %s98 = scalar_select %p95, %s96, %s97
      %p101 = pneg %p95
      %p102 = scmp.eq.s32.totalorder %s27, 3
      %p103 = por %p101, %p102
      %p104 = scmp.ne.s32.totalorder %s96, %s99
      %p105 = scmp.eq.s32.totalorder %s27, 0
      %p106 = por %p104, %p105
      %p107 = scmp.ne.s32.totalorder %s96, %s99
      %p108 = scmp.eq.s32.totalorder %s32, 3
      %p109 = por %p107, %p108
      %p110 = scmp.ne.s32.totalorder %s99, %s100
      %p111 = scmp.eq.s32.totalorder %s32, 0
      %p112 = por %p110, %p111
      %p113 = scmp.ne.s32.totalorder %s99, %s100
      %p114 = scmp.eq.s32.totalorder %s33, 3
      %p115 = por %p113, %p114
      %p117 = scmp.ne.s32.totalorder %s100, %s116
      %p118 = scmp.eq.s32.totalorder %s33, 0
      %p119 = por %p117, %p118
      %s120 = ssub.s32 %s35, %s42
      %p121 = scmp.eq.s32.totalorder %s120, 0
      %s123 = sadd.s32 %s122, 1
      %s124 = scalar_select %p121, %s122, %s123
      %p127 = pneg %p121
      %p128 = scmp.eq.s32.totalorder %s27, 3
      %p129 = por %p127, %p128
      %p130 = scmp.ne.s32.totalorder %s122, %s125
      %p131 = scmp.eq.s32.totalorder %s27, 0
      %p132 = por %p130, %p131
      %p133 = scmp.ne.s32.totalorder %s122, %s125
      %p134 = scmp.eq.s32.totalorder %s32, 3
      %p135 = por %p133, %p134
      %p136 = scmp.ne.s32.totalorder %s125, %s126
      %p137 = scmp.eq.s32.totalorder %s32, 0
      %p138 = por %p136, %p137
      %p139 = scmp.ne.s32.totalorder %s125, %s126
      %p140 = scmp.eq.s32.totalorder %s33, 3
      %p141 = por %p139, %p140
      %p143 = scmp.ne.s32.totalorder %s126, %s142
      %p144 = scmp.eq.s32.totalorder %s33, 0
      %p145 = por %p143, %p144
      %s146 = ssub.s32 %s35, %s42
      %p147 = scmp.eq.s32.totalorder %s146, 0
      %s149 = sadd.s32 %s148, 1
      %s150 = scalar_select %p147, %s148, %s149
      %p153 = pneg %p147
      %p154 = scmp.eq.s32.totalorder %s27, 3
      %p155 = por %p153, %p154
      %p156 = scmp.ne.s32.totalorder %s148, %s151
      %p157 = scmp.eq.s32.totalorder %s27, 0
      %p158 = por %p156, %p157
      %p159 = scmp.ne.s32.totalorder %s148, %s151
      %p160 = scmp.eq.s32.totalorder %s32, 3
      %p161 = por %p159, %p160
      %p162 = scmp.ne.s32.totalorder %s151, %s152
      %p163 = scmp.eq.s32.totalorder %s32, 0
      %p164 = por %p162, %p163
      %p165 = scmp.ne.s32.totalorder %s151, %s152
      %p166 = scmp.eq.s32.totalorder %s33, 3
      %p167 = por %p165, %p166
      %p169 = scmp.ne.s32.totalorder %s152, %s168
      %p170 = scmp.eq.s32.totalorder %s33, 0
      %p171 = por %p169, %p170
      %s172 = ssub.s32 %s35, %s42
      %p173 = scmp.eq.s32.totalorder %s172, 0
      %s175 = sadd.s32 %s174, 1
      %s176 = scalar_select %p173, %s174, %s175
      %p179 = pneg %p173
      %p180 = scmp.eq.s32.totalorder %s27, 3
      %p181 = por %p179, %p180
      %p182 = scmp.ne.s32.totalorder %s174, %s177
      %p183 = scmp.eq.s32.totalorder %s27, 0
      %p184 = por %p182, %p183
      %p185 = scmp.ne.s32.totalorder %s174, %s177
      %p186 = scmp.eq.s32.totalorder %s32, 3
      %p187 = por %p185, %p186
      %p188 = scmp.ne.s32.totalorder %s177, %s178
      %p189 = scmp.eq.s32.totalorder %s32, 0
      %p190 = por %p188, %p189
      %p191 = scmp.ne.s32.totalorder %s177, %s178
      %p192 = scmp.eq.s32.totalorder %s33, 3
      %p193 = por %p191, %p192
      %p195 = scmp.ne.s32.totalorder %s178, %s194
      %p196 = scmp.eq.s32.totalorder %s33, 0
      %p197 = por %p195, %p196
      %s198 = ssub.s32 %s35, %s42
      %p199 = scmp.eq.s32.totalorder %s198, 0
      %s201 = sadd.s32 %s200, 1
      %s202 = scalar_select %p199, %s200, %s201
      %p205 = pneg %p199
      %p206 = scmp.eq.s32.totalorder %s27, 3
      %p207 = por %p205, %p206
      %p208 = scmp.ne.s32.totalorder %s200, %s203
      %p209 = scmp.eq.s32.totalorder %s27, 0
      %p210 = por %p208, %p209
      %p211 = scmp.ne.s32.totalorder %s200, %s203
      %p212 = scmp.eq.s32.totalorder %s32, 3
      %p213 = por %p211, %p212
      %p214 = scmp.ne.s32.totalorder %s203, %s204
      %p215 = scmp.eq.s32.totalorder %s32, 0
      %p216 = por %p214, %p215
      %p217 = scmp.ne.s32.totalorder %s203, %s204
      %p218 = scmp.eq.s32.totalorder %s33, 3
      %p219 = por %p217, %p218
      %p221 = scmp.ne.s32.totalorder %s204, %s220
      %p222 = scmp.eq.s32.totalorder %s33, 0
      %p223 = por %p221, %p222
      %s224 = ssub.s32 %s35, %s42
      %p225 = scmp.eq.s32.totalorder %s224, 0
      %s227 = sadd.s32 %s226, 1
      %s228 = scalar_select %p225, %s226, %s227
      %p231 = pneg %p225
      %p232 = scmp.eq.s32.totalorder %s27, 3
      %p233 = por %p231, %p232
      %p234 = scmp.ne.s32.totalorder %s226, %s229
      %p235 = scmp.eq.s32.totalorder %s27, 0
      %p236 = por %p234, %p235
      %p237 = scmp.ne.s32.totalorder %s226, %s229
      %p238 = scmp.eq.s32.totalorder %s32, 3
      %p239 = por %p237, %p238
      %p240 = scmp.ne.s32.totalorder %s229, %s230
      %p241 = scmp.eq.s32.totalorder %s32, 0
      %p242 = por %p240, %p241
      %p243 = scmp.ne.s32.totalorder %s229, %s230
      %p244 = scmp.eq.s32.totalorder %s33, 3
      %p245 = por %p243, %p244
      %p247 = scmp.ne.s32.totalorder %s230, %s246
      %p248 = scmp.eq.s32.totalorder %s33, 0
      %p249 = por %p247, %p248
      %s250 = ssub.s32 %s35, %s42
      %p251 = scmp.eq.s32.totalorder %s250, 0
      %s253 = sadd.s32 %s252, 1
      %s254 = scalar_select %p251, %s252, %s253
      %p257 = pneg %p251
      %p258 = scmp.eq.s32.totalorder %s27, 3
      %p259 = por %p257, %p258
      %p260 = scmp.ne.s32.totalorder %s252, %s255
      %p261 = scmp.eq.s32.totalorder %s27, 0
      %p262 = por %p260, %p261
      %p263 = scmp.ne.s32.totalorder %s252, %s255
      %p264 = scmp.eq.s32.totalorder %s32, 3
      %p265 = por %p263, %p264
      %p266 = scmp.ne.s32.totalorder %s255, %s256
      %p267 = scmp.eq.s32.totalorder %s32, 0
      %p268 = por %p266, %p267
      %p269 = scmp.ne.s32.totalorder %s255, %s256
      %p270 = scmp.eq.s32.totalorder %s33, 3
      %p271 = por %p269, %p270
      %p273 = scmp.ne.s32.totalorder %s256, %s272
      %p274 = scmp.eq.s32.totalorder %s33, 0
      %p275 = por %p273, %p274
      %s276 = ssub.s32 %s35, %s42
      %p277 = scmp.eq.s32.totalorder %s276, 0
      %s279 = sadd.s32 %s278, 1
      %s280 = scalar_select %p277, %s278, %s279
      %p283 = pneg %p277
      %p284 = scmp.eq.s32.totalorder %s27, 3
      %p285 = por %p283, %p284
      %p286 = scmp.ne.s32.totalorder %s278, %s281
      %p287 = scmp.eq.s32.totalorder %s27, 0
      %p288 = por %p286, %p287
      %p289 = scmp.ne.s32.totalorder %s278, %s281
      %p290 = scmp.eq.s32.totalorder %s32, 3
      %p291 = por %p289, %p290
      %p292 = scmp.ne.s32.totalorder %s281, %s282
      %p293 = scmp.eq.s32.totalorder %s32, 0
      %p294 = por %p292, %p293
      %p295 = scmp.ne.s32.totalorder %s281, %s282
      %p296 = scmp.eq.s32.totalorder %s33, 3
      %p297 = por %p295, %p296
      %p299 = scmp.ne.s32.totalorder %s282, %s298
      %p300 = scmp.eq.s32.totalorder %s33, 0
      %p301 = por %p299, %p300
      %s302 = ssub.s32 %s35, %s42
      %p303 = scmp.eq.s32.totalorder %s302, 0
      %s305 = sadd.s32 %s304, 1
      %s306 = scalar_select %p303, %s304, %s305
      %p309 = pneg %p303
      %p310 = scmp.eq.s32.totalorder %s27, 3
      %p311 = por %p309, %p310
      %p312 = scmp.ne.s32.totalorder %s304, %s307
      %p313 = scmp.eq.s32.totalorder %s27, 0
      %p314 = por %p312, %p313
      %p315 = scmp.ne.s32.totalorder %s304, %s307
      %p316 = scmp.eq.s32.totalorder %s32, 3
      %p317 = por %p315, %p316
      %p318 = scmp.ne.s32.totalorder %s307, %s308
      %p319 = scmp.eq.s32.totalorder %s32, 0
      %p320 = por %p318, %p319
      %p321 = scmp.ne.s32.totalorder %s307, %s308
      %p322 = scmp.eq.s32.totalorder %s33, 3
      %p323 = por %p321, %p322
      %p325 = scmp.ne.s32.totalorder %s308, %s324
      %p326 = scmp.eq.s32.totalorder %s33, 0
      %p327 = por %p325, %p326
      %s328 = ssub.s32 %s35, %s42
      %p329 = scmp.eq.s32.totalorder %s328, 0
      %s331 = sadd.s32 %s330, 1
      %s332 = scalar_select %p329, %s330, %s331
      %p335 = pneg %p329
      %p336 = scmp.eq.s32.totalorder %s27, 3
      %p337 = por %p335, %p336
      %p338 = scmp.ne.s32.totalorder %s330, %s333
      %p339 = scmp.eq.s32.totalorder %s27, 0
      %p340 = por %p338, %p339
      %p341 = scmp.ne.s32.totalorder %s330, %s333
      %p342 = scmp.eq.s32.totalorder %s32, 3
      %p343 = por %p341, %p342
      %p344 = scmp.ne.s32.totalorder %s333, %s334
      %p345 = scmp.eq.s32.totalorder %s32, 0
      %p346 = por %p344, %p345
      %p347 = scmp.ne.s32.totalorder %s333, %s334
      %p348 = scmp.eq.s32.totalorder %s33, 3
      %p349 = por %p347, %p348
      %p351 = scmp.ne.s32.totalorder %s334, %s350
      %p352 = scmp.eq.s32.totalorder %s33, 0
      %p353 = por %p351, %p352
      %s354 = ssub.s32 %s35, %s42
      %p355 = scmp.eq.s32.totalorder %s354, 0
      %s357 = sadd.s32 %s356, 1
      %s358 = scalar_select %p355, %s356, %s357
      %p361 = pneg %p355
      %p362 = scmp.eq.s32.totalorder %s27, 3
      %p363 = por %p361, %p362
      %p364 = scmp.ne.s32.totalorder %s356, %s359
      %p365 = scmp.eq.s32.totalorder %s27, 0
      %p366 = por %p364, %p365
      %p367 = scmp.ne.s32.totalorder %s356, %s359
      %p368 = scmp.eq.s32.totalorder %s32, 3
      %p369 = por %p367, %p368
      %p370 = scmp.ne.s32.totalorder %s359, %s360
      %p371 = scmp.eq.s32.totalorder %s32, 0
      %p372 = por %p370, %p371
      %p373 = scmp.ne.s32.totalorder %s359, %s360
      %p374 = scmp.eq.s32.totalorder %s33, 3
      %p375 = por %p373, %p374
      %p377 = scmp.ne.s32.totalorder %s360, %s376
      %p378 = scmp.eq.s32.totalorder %s33, 0
      %p379 = por %p377, %p378
      %s380 = ssub.s32 %s35, %s42
      %p381 = scmp.eq.s32.totalorder %s380, 0
      %s383 = sadd.s32 %s382, 1
      %s384 = scalar_select %p381, %s382, %s383
      %p387 = pneg %p381
      %p388 = scmp.eq.s32.totalorder %s27, 3
      %p389 = por %p387, %p388
      %p390 = scmp.ne.s32.totalorder %s382, %s385
      %p391 = scmp.eq.s32.totalorder %s27, 0
      %p392 = por %p390, %p391
      %p393 = scmp.ne.s32.totalorder %s382, %s385
      %p394 = scmp.eq.s32.totalorder %s32, 3
      %p395 = por %p393, %p394
      %p396 = scmp.ne.s32.totalorder %s385, %s386
      %p397 = scmp.eq.s32.totalorder %s32, 0
      %p398 = por %p396, %p397
      %p399 = scmp.ne.s32.totalorder %s385, %s386
      %p400 = scmp.eq.s32.totalorder %s33, 3
      %p401 = por %p399, %p400
      %p403 = scmp.ne.s32.totalorder %s386, %s402
      %p404 = scmp.eq.s32.totalorder %s33, 0
      %p405 = por %p403, %p404
      %s406 = ssub.s32 %s34, %s46
      %p407 = scmp.eq.s32.totalorder %s406, 0
      %s409 = sadd.s32 %s408, 1
      %s410 = scalar_select %p407, %s408, %s409
      %p413 = pneg %p407
      %p414 = scmp.eq.s32.totalorder %s27, 3
      %p415 = por %p413, %p414
      %p416 = scmp.ne.s32.totalorder %s408, %s411
      %p417 = scmp.eq.s32.totalorder %s27, 0
      %p418 = por %p416, %p417
      %p419 = scmp.ne.s32.totalorder %s408, %s411
      %p420 = scmp.eq.s32.totalorder %s32, 3
      %p421 = por %p419, %p420
      %p422 = scmp.ne.s32.totalorder %s411, %s412
      %p423 = scmp.eq.s32.totalorder %s32, 0
      %p424 = por %p422, %p423
      %p425 = scmp.ne.s32.totalorder %s411, %s412
      %p426 = scmp.eq.s32.totalorder %s33, 3
      %p427 = por %p425, %p426
      %p429 = scmp.ne.s32.totalorder %s412, %s428
      %p430 = scmp.eq.s32.totalorder %s33, 0
      %p431 = por %p429, %p430
      %p432 = scmp.le.s32.totalorder 1, %s27
      %p433 = scmp.lt.s32.totalorder %s27, 5
      %p434 = pnand %p432, %p433
      %p435 = pneg %p434
      // Predicated region
      $region9: #{tpu_custom_call.1} parent=5 // pred_check
        _
      $region10: #{tpu_custom_call.1} parent=5 // pred_check_branch
        %437 = sbr.rel (%p434) target = $region12
      $region11: #{tpu_custom_call.1} parent=5 // pred_region
        %s438 = ssub.s32 %s27, 1
        // Predicated region
        $region13: #{tpu_custom_call.1} parent=11 // pred_check
          %p439 = pneg %p86
        $region14: #{tpu_custom_call.1} parent=11 // pred_check_branch
          %441 = sbr.rel (%p439) target = $region16
        $region15: #{tpu_custom_call.1} parent=11 // pred_region
          %s443 = ssub.s32 128, 128
          %444 = vsyncadd [#allocation8], %s443
          %s446 = sshll.u32 [#allocation7], 4
          %s447 = int_to_ptr.vmem [resolvable:$true] %s446
          %449 = dma.hbm_to_vmem [thread:$0]  %s1, 128, %s447, [#allocation8]
        $region16: #{tpu_custom_call.1} parent=11 // pred_fallthru
          _
      $region12: #{tpu_custom_call.1} parent=5 // pred_fallthru
        _
      %p450 = scmp.lt.s32.totalorder %s27, 4
      // Predicated region
      $region17: #{tpu_custom_call.1} parent=5 // pred_check
        %p451 = pneg %p450
      $region18: #{tpu_custom_call.1} parent=5 // pred_check_branch
        %453 = sbr.rel (%p451) target = $region20
      $region19: #{tpu_custom_call.1} parent=5 // pred_region
        // Predicated region
        $region21: #{tpu_custom_call.1} parent=19 // pred_check
          %p454 = pneg %p59
        $region22: #{tpu_custom_call.1} parent=19 // pred_check_branch
          %456 = sbr.rel (%p454) target = $region24
        $region23: #{tpu_custom_call.1} parent=19 // pred_region
          %s457 = sand.u32 %s27, 1
          %s458 = scalar_lea.sflag [#allocation5], %s457
          %s459 = sand.u32 %s49, 1
          %s460 = smul.addr %s459, 8
          %s461 = scalar_lea.vmem [#allocation4], %s460
          %s463 = ssub.s32 128, 128
          %464 = vsyncadd %s458, %s463
          %s465 = smul.addr %s34, 128
          %s466 = scalar_lea.hbm %s0, %s465
          %s468 = sshll.u32 %s461, 4
          %s469 = int_to_ptr.vmem [resolvable:$true] %s468
          %471 = dma.hbm_to_vmem [thread:$0]  %s466, 128, %s469, %s458
        $region24: #{tpu_custom_call.1} parent=19 // pred_fallthru
          _
        // Predicated region
        $region25: #{tpu_custom_call.1} parent=19 // pred_check
          %p472 = pneg %p106
        $region26: #{tpu_custom_call.1} parent=19 // pred_check_branch
          %474 = sbr.rel (%p472) target = $region28
        $region27: #{tpu_custom_call.1} parent=19 // pred_region
          %p475 = scmp.lt.s32.totalorder %s35, 1
          %s476 = scalar_select %p475, %s35, 1
          %s477 = smul.addr %s476, 4
          %s478 = smul.addr %s477, 4
          %s479 = scalar_lea.vmem %s2, %s478
        $region28: #{tpu_custom_call.1} parent=19 // pred_fallthru
          _
        // Predicated region
        $region29: #{tpu_custom_call.1} parent=19 // pred_check
          %p480 = pneg %p132
        $region30: #{tpu_custom_call.1} parent=19 // pred_check_branch
          %482 = sbr.rel (%p480) target = $region32
        $region31: #{tpu_custom_call.1} parent=19 // pred_region
          %p483 = scmp.lt.s32.totalorder %s35, 1
          %s484 = scalar_select %p483, %s35, 1
          %s485 = scalar_lea.vmem %s3, %s484
        $region32: #{tpu_custom_call.1} parent=19 // pred_fallthru
          _
        // Predicated region
        $region33: #{tpu_custom_call.1} parent=19 // pred_check
          %p486 = pneg %p158
        $region34: #{tpu_custom_call.1} parent=19 // pred_check_branch
          %488 = sbr.rel (%p486) target = $region36
        $region35: #{tpu_custom_call.1} parent=19 // pred_region
          %p489 = scmp.lt.s32.totalorder %s35, 1
          %s490 = scalar_select %p489, %s35, 1
          %s491 = smul.addr %s490, 4
          %s492 = smul.addr %s491, 4
          %s493 = scalar_lea.vmem %s4, %s492
        $region36: #{tpu_custom_call.1} parent=19 // pred_fallthru
          _
        // Predicated region
        $region37: #{tpu_custom_call.1} parent=19 // pred_check
          %p494 = pneg %p184
        $region38: #{tpu_custom_call.1} parent=19 // pred_check_branch
          %496 = sbr.rel (%p494) target = $region40
        $region39: #{tpu_custom_call.1} parent=19 // pred_region
          %p497 = scmp.lt.s32.totalorder %s35, 1
          %s498 = scalar_select %p497, %s35, 1
          %s499 = scalar_lea.vmem %s5, %s498
        $region40: #{tpu_custom_call.1} parent=19 // pred_fallthru
          _
        // Predicated region
        $region41: #{tpu_custom_call.1} parent=19 // pred_check
          %p500 = pneg %p210
        $region42: #{tpu_custom_call.1} parent=19 // pred_check_branch
          %502 = sbr.rel (%p500) target = $region44
        $region43: #{tpu_custom_call.1} parent=19 // pred_region
          %s503 = sand.u32 %s27, 1
          %s504 = scalar_lea.sflag [#allocation5], %s503
          %s505 = sand.u32 %s200, 1
          %s506 = scalar_lea.vmem [#allocation9], %s505
          %s508 = ssub.s32 16, 16
          %509 = vsyncadd %s504, %s508
          %s510 = smul.addr %s35, 16
          %s511 = scalar_lea.hbm %s6, %s510
          %s513 = sshll.u32 %s506, 4
          %s514 = int_to_ptr.vmem [resolvable:$true] %s513
          %516 = dma.hbm_to_vmem [thread:$0]  %s511, 16, %s514, %s504
        $region44: #{tpu_custom_call.1} parent=19 // pred_fallthru
          _
        // Predicated region
        $region45: #{tpu_custom_call.1} parent=19 // pred_check
          %p517 = pneg %p236
        $region46: #{tpu_custom_call.1} parent=19 // pred_check_branch
          %519 = sbr.rel (%p517) target = $region48
        $region47: #{tpu_custom_call.1} parent=19 // pred_region
          %s520 = sand.u32 %s27, 1
          %s521 = scalar_lea.sflag [#allocation5], %s520
          %s522 = sand.u32 %s226, 1
          %s523 = scalar_lea.vmem [#allocation10], %s522
          %s525 = ssub.s32 16, 16
          %526 = vsyncadd %s521, %s525
          %s527 = smul.addr %s35, 16
          %s528 = scalar_lea.hbm %s7, %s527
          %s530 = sshll.u32 %s523, 4
          %s531 = int_to_ptr.vmem [resolvable:$true] %s530
          %533 = dma.hbm_to_vmem [thread:$0]  %s528, 16, %s531, %s521
        $region48: #{tpu_custom_call.1} parent=19 // pred_fallthru
          _
        // Predicated region
        $region49: #{tpu_custom_call.1} parent=19 // pred_check
          %p534 = pneg %p262
        $region50: #{tpu_custom_call.1} parent=19 // pred_check_branch
          %536 = sbr.rel (%p534) target = $region52
        $region51: #{tpu_custom_call.1} parent=19 // pred_region
          %p537 = scmp.lt.s32.totalorder %s35, 1
          %s538 = scalar_select %p537, %s35, 1
          %s539 = smul.addr %s538, 4
          %s540 = smul.addr %s539, 4
          %s541 = scalar_lea.vmem %s8, %s540
        $region52: #{tpu_custom_call.1} parent=19 // pred_fallthru
          _
        // Predicated region
        $region53: #{tpu_custom_call.1} parent=19 // pred_check
          %p542 = pneg %p288
        $region54: #{tpu_custom_call.1} parent=19 // pred_check_branch
          %544 = sbr.rel (%p542) target = $region56
        $region55: #{tpu_custom_call.1} parent=19 // pred_region
          %s545 = sand.u32 %s27, 1
          %s546 = scalar_lea.sflag [#allocation5], %s545
          %s547 = sand.u32 %s278, 1
          %s548 = scalar_lea.vmem [#allocation11], %s547
          %s550 = ssub.s32 16, 16
          %551 = vsyncadd %s546, %s550
          %s552 = smul.addr %s35, 16
          %s553 = scalar_lea.hbm %s9, %s552
          %s555 = sshll.u32 %s548, 4
          %s556 = int_to_ptr.vmem [resolvable:$true] %s555
          %558 = dma.hbm_to_vmem [thread:$0]  %s553, 16, %s556, %s546
        $region56: #{tpu_custom_call.1} parent=19 // pred_fallthru
          _
        // Predicated region
        $region57: #{tpu_custom_call.1} parent=19 // pred_check
          %p559 = pneg %p314
        $region58: #{tpu_custom_call.1} parent=19 // pred_check_branch
          %561 = sbr.rel (%p559) target = $region60
        $region59: #{tpu_custom_call.1} parent=19 // pred_region
          %p562 = scmp.lt.s32.totalorder %s35, 1
          %s563 = scalar_select %p562, %s35, 1
          %s564 = smul.addr %s563, 8
          %s565 = smul.addr %s564, 4
          %s566 = scalar_lea.vmem %s10, %s565
        $region60: #{tpu_custom_call.1} parent=19 // pred_fallthru
          _
        // Predicated region
        $region61: #{tpu_custom_call.1} parent=19 // pred_check
          %p567 = pneg %p340
        $region62: #{tpu_custom_call.1} parent=19 // pred_check_branch
          %569 = sbr.rel (%p567) target = $region64
        $region63: #{tpu_custom_call.1} parent=19 // pred_region
          %p570 = scmp.lt.s32.totalorder %s35, 1
          %s571 = scalar_select %p570, %s35, 1
          %s572 = scalar_lea.vmem %s11, %s571
        $region64: #{tpu_custom_call.1} parent=19 // pred_fallthru
          _
        // Predicated region
        $region65: #{tpu_custom_call.1} parent=19 // pred_check
          %p573 = pneg %p366
        $region66: #{tpu_custom_call.1} parent=19 // pred_check_branch
          %575 = sbr.rel (%p573) target = $region68
        $region67: #{tpu_custom_call.1} parent=19 // pred_region
          %p576 = scmp.lt.s32.totalorder %s35, 1
          %s577 = scalar_select %p576, %s35, 1
          %s578 = scalar_lea.vmem %s12, %s577
        $region68: #{tpu_custom_call.1} parent=19 // pred_fallthru
          _
        // Predicated region
        $region69: #{tpu_custom_call.1} parent=19 // pred_check
          %p579 = pneg %p392
        $region70: #{tpu_custom_call.1} parent=19 // pred_check_branch
          %581 = sbr.rel (%p579) target = $region72
        $region71: #{tpu_custom_call.1} parent=19 // pred_region
          %p582 = scmp.lt.s32.totalorder %s35, 1
          %s583 = scalar_select %p582, %s35, 1
          %s584 = scalar_lea.vmem %s13, %s583
        $region72: #{tpu_custom_call.1} parent=19 // pred_fallthru
          _
      $region20: #{tpu_custom_call.1} parent=5 // pred_fallthru
        _
      %p585 = scmp.le.s32.totalorder 1, %s27
      %p586 = scmp.lt.s32.totalorder %s27, 5
      %p587 = pnand %p585, %p586
      %p588 = pneg %p587
      // Predicated region
      $region73: #{tpu_custom_call.1} parent=5 // pred_check
        _
      $region74: #{tpu_custom_call.1} parent=5 // pred_check_branch
        %590 = sbr.rel (%p587) target = $region76
      $region75: #{tpu_custom_call.1} parent=5 // pred_region
        %s591 = ssub.s32 %s27, 1
        %s592 = sand.u32 %s32, 1
        %s593 = scalar_lea.sflag [#allocation5], %s592
        %s594 = sand.u32 %s52, 1
        %s595 = smul.addr %s594, 8
        %s596 = scalar_lea.vmem [#allocation4], %s595
        // Predicated region
        $region77: #{tpu_custom_call.1} parent=75 // pred_check
          %p597 = pneg %p65
        $region78: #{tpu_custom_call.1} parent=75 // pred_check_branch
          %599 = sbr.rel (%p597) target = $region80
        $region79: #{tpu_custom_call.1} parent=75 // pred_region
          %600 = dma.done %s593, 128
        $region80: #{tpu_custom_call.1} parent=75 // pred_fallthru
          _
        // Predicated region
        $region81: #{tpu_custom_call.1} parent=75 // pred_check
          %p601 = pneg %p86
        $region82: #{tpu_custom_call.1} parent=75 // pred_check_branch
          %603 = sbr.rel (%p601) target = $region84
        $region83: #{tpu_custom_call.1} parent=75 // pred_region
          %604 = dma.done [#allocation8], 128
        $region84: #{tpu_custom_call.1} parent=75 // pred_fallthru
          _
        %s605 = sand.u32 %s32, 1
        %s606 = scalar_lea.sflag [#allocation5], %s605
        %s607 = sand.u32 %s203, 1
        %s608 = scalar_lea.vmem [#allocation9], %s607
        // Predicated region
        $region85: #{tpu_custom_call.1} parent=75 // pred_check
          %p609 = pneg %p216
        $region86: #{tpu_custom_call.1} parent=75 // pred_check_branch
          %611 = sbr.rel (%p609) target = $region88
        $region87: #{tpu_custom_call.1} parent=75 // pred_region
          %612 = dma.done %s606, 16
        $region88: #{tpu_custom_call.1} parent=75 // pred_fallthru
          _
        %s613 = sand.u32 %s32, 1
        %s614 = scalar_lea.sflag [#allocation5], %s613
        %s615 = sand.u32 %s229, 1
        %s616 = scalar_lea.vmem [#allocation10], %s615
        // Predicated region
        $region89: #{tpu_custom_call.1} parent=75 // pred_check
          %p617 = pneg %p242
        $region90: #{tpu_custom_call.1} parent=75 // pred_check_branch
          %619 = sbr.rel (%p617) target = $region92
        $region91: #{tpu_custom_call.1} parent=75 // pred_region
          %620 = dma.done %s614, 16
        $region92: #{tpu_custom_call.1} parent=75 // pred_fallthru
          _
        %s621 = sand.u32 %s32, 1
        %s622 = scalar_lea.sflag [#allocation5], %s621
        %s623 = sand.u32 %s281, 1
        %s624 = scalar_lea.vmem [#allocation11], %s623
        // Predicated region
        $region93: #{tpu_custom_call.1} parent=75 // pred_check
          %p625 = pneg %p294
        $region94: #{tpu_custom_call.1} parent=75 // pred_check_branch
          %627 = sbr.rel (%p625) target = $region96
        $region95: #{tpu_custom_call.1} parent=75 // pred_region
          %628 = dma.done %s622, 16
        $region96: #{tpu_custom_call.1} parent=75 // pred_fallthru
          _
        %s629 = sand.u32 %s32, 1
        %s630 = scalar_lea.sflag [#allocation5], %s629
        %s631 = sand.u32 %s52, 1
        %s632 = smul.addr %s631, 8
        %s633 = scalar_lea.vmem [#allocation4], %s632
        %p634 = pneg %p65
        %p635 = pneg %p62
        %p636 = pneg %p86
        %p637 = pneg %p83
        %p638 = scmp.lt.s32.totalorder %s37, 1
        %s639 = scalar_select %p638, %s37, 1
        %s640 = smul.addr %s639, 4
        %s641 = smul.addr %s640, 4
        %s642 = scalar_lea.vmem %s2, %s641
        %p643 = pneg %p112
        %p644 = pneg %p109
        %p645 = scmp.lt.s32.totalorder %s37, 1
        %s646 = scalar_select %p645, %s37, 1
        %s647 = scalar_lea.vmem %s3, %s646
        %p648 = pneg %p138
        %p649 = pneg %p135
        %p650 = scmp.lt.s32.totalorder %s37, 1
        %s651 = scalar_select %p650, %s37, 1
        %s652 = smul.addr %s651, 4
        %s653 = smul.addr %s652, 4
        %s654 = scalar_lea.vmem %s4, %s653
        %p655 = pneg %p164
        %p656 = pneg %p161
        %p657 = scmp.lt.s32.totalorder %s37, 1
        %s658 = scalar_select %p657, %s37, 1
        %s659 = scalar_lea.vmem %s5, %s658
        %p660 = pneg %p190
        %p661 = pneg %p187
        %s662 = sand.u32 %s32, 1
        %s663 = scalar_lea.sflag [#allocation5], %s662
        %s664 = sand.u32 %s203, 1
        %s665 = scalar_lea.vmem [#allocation9], %s664
        %p666 = pneg %p216
        %p667 = pneg %p213
        %s668 = sand.u32 %s32, 1
        %s669 = scalar_lea.sflag [#allocation5], %s668
        %s670 = sand.u32 %s229, 1
        %s671 = scalar_lea.vmem [#allocation10], %s670
        %p672 = pneg %p242
        %p673 = pneg %p239
        %p674 = scmp.lt.s32.totalorder %s37, 1
        %s675 = scalar_select %p674, %s37, 1
        %s676 = smul.addr %s675, 4
        %s677 = smul.addr %s676, 4
        %s678 = scalar_lea.vmem %s8, %s677
        %p679 = pneg %p268
        %p680 = pneg %p265
        %s681 = sand.u32 %s32, 1
        %s682 = scalar_lea.sflag [#allocation5], %s681
        %s683 = sand.u32 %s281, 1
        %s684 = scalar_lea.vmem [#allocation11], %s683
        %p685 = pneg %p294
        %p686 = pneg %p291
        %p687 = scmp.lt.s32.totalorder %s37, 1
        %s688 = scalar_select %p687, %s37, 1
        %s689 = smul.addr %s688, 8
        %s690 = smul.addr %s689, 4
        %s691 = scalar_lea.vmem %s10, %s690
        %p692 = pneg %p320
        %p693 = pneg %p317
        %p694 = scmp.lt.s32.totalorder %s37, 1
        %s695 = scalar_select %p694, %s37, 1
        %s696 = scalar_lea.vmem %s11, %s695
        %p697 = pneg %p346
        %p698 = pneg %p343
        %p699 = scmp.lt.s32.totalorder %s37, 1
        %s700 = scalar_select %p699, %s37, 1
        %s701 = scalar_lea.vmem %s12, %s700
        %p702 = pneg %p372
        %p703 = pneg %p369
        %p704 = scmp.lt.s32.totalorder %s37, 1
        %s705 = scalar_select %p704, %s37, 1
        %s706 = scalar_lea.vmem %s13, %s705
        %p707 = pneg %p398
        %p708 = pneg %p395
        %p709 = pneg %p424
        %p710 = pneg %p421
        %s711 = sand.u32 %s411, 1
        %s712 = scalar_lea.sflag [#allocation6], %s711
        %s713 = sand.u32 %s411, 1
        %s714 = smul.addr %s713, 8
        %s715 = scalar_lea.vmem [#allocation12], %s714
        %p716 = scmp.lt.s32.totalorder %s37, 1
        %s717 = scalar_select %p716, %s37, 1
        %s718 = smul.addr %s717, 4
        %s719 = smul.addr %s718, 4
        %s720 = scalar_lea.vmem %s2, %s719
        %p721 = scmp.lt.s32.totalorder %s37, 1
        %s722 = scalar_select %p721, %s37, 1
        %s723 = scalar_lea.vmem %s3, %s722
        %p724 = scmp.lt.s32.totalorder %s37, 1
        %s725 = scalar_select %p724, %s37, 1
        %s726 = smul.addr %s725, 4
        %s727 = smul.addr %s726, 4
        %s728 = scalar_lea.vmem %s4, %s727
        %p729 = scmp.lt.s32.totalorder %s37, 1
        %s730 = scalar_select %p729, %s37, 1
        %s731 = scalar_lea.vmem %s5, %s730
        %p732 = scmp.lt.s32.totalorder %s37, 1
        %s733 = scalar_select %p732, %s37, 1
        %s734 = smul.addr %s733, 4
        %s735 = smul.addr %s734, 4
        %s736 = scalar_lea.vmem %s8, %s735
        %p737 = scmp.lt.s32.totalorder %s37, 1
        %s738 = scalar_select %p737, %s37, 1
        %s739 = smul.addr %s738, 8
        %s740 = smul.addr %s739, 4
        %s741 = scalar_lea.vmem %s10, %s740
        %p742 = scmp.lt.s32.totalorder %s37, 1
        %s743 = scalar_select %p742, %s37, 1
        %s744 = scalar_lea.vmem %s11, %s743
        %p745 = scmp.lt.s32.totalorder %s37, 1
        %s746 = scalar_select %p745, %s37, 1
        %s747 = scalar_lea.vmem %s12, %s746
        %p748 = scmp.lt.s32.totalorder %s37, 1
        %s749 = scalar_select %p748, %s37, 1
        %s750 = scalar_lea.vmem %s13, %s749
        %p752 = scmp.eq.s32.totalorder %s37, 0
        // Predicated region
        $region97: #{tpu_custom_call.1} parent=75 // pred_check
          %p753 = pneg %p752
        $region98: #{tpu_custom_call.1} parent=75 // pred_check_branch
          %755 = sbr.rel (%p753) target = $region100
        $region99: #{tpu_custom_call.1} parent=75 // pred_region
          %v756 = vld [vmem:[%s596] sm:$0xff]
          %vm757 = vcmask 261120
          %758 = vst.msk [vmem:[#allocation2] sm:$0xff] %vm757, %v756
        $region100: #{tpu_custom_call.1} parent=75 // pred_fallthru
          _
        %v759 = vld [vmem:[#allocation2] sm:$0xff]
        %v760 = vpack.c.bf16 %v759, %v759
        %v761 = vld [vmem:[%s720] sm:$0xf]
        %v762 = vld [vmem:[%s720 + $0x4] sm:$0xf]
        %v763 = vld [vmem:[%s720 + $0x8] sm:$0xf]
        %v764 = vld [vmem:[%s720 + $0xc] sm:$0xf]
        %v765 = vld [vmem:[%s723] sm:$0x1]
        %v767 = vlaneseq
        %v768 = vshrl.u32 %v767, 7
        %v769 = vsub.s32 0, %v768
        %v770 = vrot.slane %v765, %v769
        %v776 = vunpack.c.l.b16 %v761
        %v777 = vunpack.c.l.b16 %v762
        %v778 = vunpack.c.l.b16 %v763
        %v779 = vunpack.c.l.b16 %v764
        %v780 = vpack.c.b16 %v777, %v776
        %v781 = vpack.c.b16 %v779, %v778
        %vm784 = vcmask 261120
        %v786 = vsel %vm784, %v760, 0
        %788 = vmatprep.subr.bf16.mxu0 0
        %789 = vmatpush1.bf16.msra.mxu0 %v780
        %790 = vmatprep.subr.bf16.mxu0 0
        %791 = vmatpush1.bf16.msra.mxu0 %v781
        %792 = vmatprep.subr.bf16.mxu0 0
        %793 = vmatpush1.bf16.msra.mxu0 0
        %794 = vmatprep.subr.bf16.mxu0 0
        %795 = vmatpush1.bf16.msra.mxu0 0
        %796 = vmatprep.subr.bf16.mxu0 0
        %797 = vmatpush1.bf16.msra.mxu0 0
        %798 = vmatprep.subr.bf16.mxu0 0
        %799 = vmatpush1.bf16.msra.mxu0 0
        %800 = vmatprep.subr.bf16.mxu0 0
        %801 = vmatpush1.bf16.msra.mxu0 0
        %802 = vmatprep.subr.bf16.mxu0 0
        %803 = vmatpush1.bf16.msra.mxu0 0
        %804 = vmatprep.subr.bf16.mxu0 0
        %805 = vmatpush1.bf16.msra.mxu0 0
        %806 = vmatprep.subr.bf16.mxu0 0
        %807 = vmatpush1.bf16.msra.mxu0 0
        %808 = vmatprep.subr.bf16.mxu0 0
        %809 = vmatpush1.bf16.msra.mxu0 0
        %810 = vmatprep.subr.bf16.mxu0 0
        %811 = vmatpush1.bf16.msra.mxu0 0
        %812 = vmatprep.subr.bf16.mxu0 0
        %813 = vmatpush1.bf16.msra.mxu0 0
        %814 = vmatprep.subr.bf16.mxu0 0
        %815 = vmatpush1.bf16.msra.mxu0 0
        %816 = vmatprep.subr.bf16.mxu0 0
        %817 = vmatpush1.bf16.msra.mxu0 0
        %818 = vmatprep.subr.bf16.mxu0 0
        %819 = vmatpush1.bf16.msra.mxu0 0
        %820 = vmatprep.mubr.bf16.mxu0 0
        %821 = vmatmul.mubr.bf16.gmra.mrb[0].mxu0 %v786
        %v822 = vpop.f32.mrb[0].mxu0
        %v823 = vadd.f32 %v770, %v822
        %v824 = vpop.f32.mrb[0].mxu0
        %v825 = vpop.f32.mrb[0].mxu0
        %v826 = vpop.f32.mrb[0].mxu0
        %827 = vdwg.mxu0
        %v828 = vmul.f32 %v823, 0.25
        %v829 = vpack.c.bf16 %v828, %v828
        %v830 = vpack.c.bf16 %v823, %v823
        %v831 = vld [vmem:[#allocation7] sm:$0xff]
        %vm832 = vcmp.gt.f32.partialorder %v831, 0.0
        %834 = vrot.lane.b32.xlu0 %v830, 96
        %v835 = vpop.permute.xlu0 %834
        %vm836 = vcmask 130048
        %v838 = vsel %vm836, %v829, 0
        %v841 = vsel %vm836, %v835, 0
        %843 = vmatprep.subr.bf16.mxu0 0
        %844 = vmatpush1.bf16.xpose.msra.mxu0 %v841
        %845 = vmatprep.subr.bf16.mxu0 0
        %846 = vmatpush1.bf16.xpose.msra.mxu0 0
        %847 = vmatprep.subr.bf16.mxu0 0
        %848 = vmatpush1.bf16.xpose.msra.mxu0 0
        %849 = vmatprep.subr.bf16.mxu0 0
        %850 = vmatpush1.bf16.xpose.msra.mxu0 0
        %851 = vmatprep.subr.bf16.mxu0 0
        %852 = vmatpush1.bf16.xpose.msra.mxu0 0
        %853 = vmatprep.subr.bf16.mxu0 0
        %854 = vmatpush1.bf16.xpose.msra.mxu0 0
        %855 = vmatprep.subr.bf16.mxu0 0
        %856 = vmatpush1.bf16.xpose.msra.mxu0 0
        %857 = vmatprep.subr.bf16.mxu0 0
        %858 = vmatpush1.bf16.xpose.msra.mxu0 0
        %859 = vmatprep.subr.bf16.mxu0 0
        %860 = vmatpush1.bf16.xpose.msra.mxu0 0
        %861 = vmatprep.subr.bf16.mxu0 0
        %862 = vmatpush1.bf16.xpose.msra.mxu0 0
        %863 = vmatprep.subr.bf16.mxu0 0
        %864 = vmatpush1.bf16.xpose.msra.mxu0 0
        %865 = vmatprep.subr.bf16.mxu0 0
        %866 = vmatpush1.bf16.xpose.msra.mxu0 0
        %867 = vmatprep.subr.bf16.mxu0 0
        %868 = vmatpush1.bf16.xpose.msra.mxu0 0
        %869 = vmatprep.subr.bf16.mxu0 0
        %870 = vmatpush1.bf16.xpose.msra.mxu0 0
        %871 = vmatprep.subr.bf16.mxu0 0
        %872 = vmatpush1.bf16.xpose.msra.mxu0 0
        %873 = vmatprep.subr.bf16.mxu0 0
        %874 = vmatpush1.bf16.xpose.msra.mxu0 0
        %875 = vmatprep.mubr.bf16.mxu0 0
        %876 = vmatmul.mubr.bf16.gmra.mrb[0].mxu0 %v838
        %v877 = vpop.f32.mrb[0].mxu0
        %v878 = vadd.f32 0.0, %v877
        %v879 = vpop.f32.mrb[0].mxu0
        %v880 = vpop.f32.mrb[0].mxu0
        %v881 = vpop.f32.mrb[0].mxu0
        %882 = vdwg.mxu0
        %v883 = vsel %vm832, %v878, -1e+20
        %vm884 = vcmask 64512
        %v885 = vsel %vm884, %v883, -inf
        %886 = vmax.xlane.f32.xlu0 %v885
        %v887 = vpop.xlane.xlu0 %886
        %v888 = vsub.f32 %v883, %v887
        %v889 = vmul.f32 %v888, 1.442695
        %v890 = vpow.pop %v889
        %v891 = vsel %vm884, %v890, 0.0
        %892 = vadd.xlane.f32.xlu0 %v891
        %v893 = vpop.xlane.xlu0 %892
        %v894 = vrcp.pop %v893
        %v895 = vmul.f32 %v890, %v894
        %v896 = vpack.c.bf16 %v895, %v895
        %897 = vrot.lane.b32.xlu0 %v830, 64
        %v898 = vpop.permute.xlu0 %897
        %v900 = vsel %vm884, %v896, 0
        %vm902 = vcmask 1043456
        %v904 = vsel %vm902, %v898, 0
        %906 = vmatprep.subr.bf16.mxu0 0
        %907 = vmatpush1.bf16.msra.mxu0 %v904
        %908 = vmatprep.subr.bf16.mxu0 0
        %909 = vmatpush1.bf16.msra.mxu0 0
        %910 = vmatprep.subr.bf16.mxu0 0
        %911 = vmatpush1.bf16.msra.mxu0 0
        %912 = vmatprep.subr.bf16.mxu0 0
        %913 = vmatpush1.bf16.msra.mxu0 0
        %914 = vmatprep.subr.bf16.mxu0 0
        %915 = vmatpush1.bf16.msra.mxu0 0
        %916 = vmatprep.subr.bf16.mxu0 0
        %917 = vmatpush1.bf16.msra.mxu0 0
        %918 = vmatprep.subr.bf16.mxu0 0
        %919 = vmatpush1.bf16.msra.mxu0 0
        %920 = vmatprep.subr.bf16.mxu0 0
        %921 = vmatpush1.bf16.msra.mxu0 0
        %922 = vmatprep.subr.bf16.mxu0 0
        %923 = vmatpush1.bf16.msra.mxu0 0
        %924 = vmatprep.subr.bf16.mxu0 0
        %925 = vmatpush1.bf16.msra.mxu0 0
        %926 = vmatprep.subr.bf16.mxu0 0
        %927 = vmatpush1.bf16.msra.mxu0 0
        %928 = vmatprep.subr.bf16.mxu0 0
        %929 = vmatpush1.bf16.msra.mxu0 0
        %930 = vmatprep.subr.bf16.mxu0 0
        %931 = vmatpush1.bf16.msra.mxu0 0
        %932 = vmatprep.subr.bf16.mxu0 0
        %933 = vmatpush1.bf16.msra.mxu0 0
        %934 = vmatprep.subr.bf16.mxu0 0
        %935 = vmatpush1.bf16.msra.mxu0 0
        %936 = vmatprep.subr.bf16.mxu0 0
        %937 = vmatpush1.bf16.msra.mxu0 0
        %938 = vmatprep.mubr.bf16.mxu0 0
        %939 = vmatmul.mubr.bf16.gmra.mrb[0].mxu0 %v900
        %v940 = vpop.f32.mrb[0].mxu0
        %v941 = vadd.f32 0.0, %v940
        %v942 = vpop.f32.mrb[0].mxu0
        %v943 = vpop.f32.mrb[0].mxu0
        %v944 = vpop.f32.mrb[0].mxu0
        %945 = vdwg.mxu0
        %946 = vst.msk [vmem:[#allocation3] sm:$0xff] %vm836, %v941
        %948 = vrot.lane.b32.xlu0 %v829, 112
        %v949 = vpop.permute.xlu0 %948
        %950 = vrot.lane.b32.xlu0 %v830, 80
        %v951 = vpop.permute.xlu0 %950
        %v953 = vsel %vm836, %v949, 0
        %v956 = vsel %vm836, %v951, 0
        %958 = vmatprep.subr.bf16.mxu0 0
        %959 = vmatpush1.bf16.xpose.msra.mxu0 %v956
        %960 = vmatprep.subr.bf16.mxu0 0
        %961 = vmatpush1.bf16.xpose.msra.mxu0 0
        %962 = vmatprep.subr.bf16.mxu0 0
        %963 = vmatpush1.bf16.xpose.msra.mxu0 0
        %964 = vmatprep.subr.bf16.mxu0 0
        %965 = vmatpush1.bf16.xpose.msra.mxu0 0
        %966 = vmatprep.subr.bf16.mxu0 0
        %967 = vmatpush1.bf16.xpose.msra.mxu0 0
        %968 = vmatprep.subr.bf16.mxu0 0
        %969 = vmatpush1.bf16.xpose.msra.mxu0 0
        %970 = vmatprep.subr.bf16.mxu0 0
        %971 = vmatpush1.bf16.xpose.msra.mxu0 0
        %972 = vmatprep.subr.bf16.mxu0 0
        %973 = vmatpush1.bf16.xpose.msra.mxu0 0
        %974 = vmatprep.subr.bf16.mxu0 0
        %975 = vmatpush1.bf16.xpose.msra.mxu0 0
        %976 = vmatprep.subr.bf16.mxu0 0
        %977 = vmatpush1.bf16.xpose.msra.mxu0 0
        %978 = vmatprep.subr.bf16.mxu0 0
        %979 = vmatpush1.bf16.xpose.msra.mxu0 0
        %980 = vmatprep.subr.bf16.mxu0 0
        %981 = vmatpush1.bf16.xpose.msra.mxu0 0
        %982 = vmatprep.subr.bf16.mxu0 0
        %983 = vmatpush1.bf16.xpose.msra.mxu0 0
        %984 = vmatprep.subr.bf16.mxu0 0
        %985 = vmatpush1.bf16.xpose.msra.mxu0 0
        %986 = vmatprep.subr.bf16.mxu0 0
        %987 = vmatpush1.bf16.xpose.msra.mxu0 0
        %988 = vmatprep.subr.bf16.mxu0 0
        %989 = vmatpush1.bf16.xpose.msra.mxu0 0
        %990 = vmatprep.mubr.bf16.mxu0 0
        %991 = vmatmul.mubr.bf16.gmra.mrb[0].mxu0 %v953
        %v992 = vpop.f32.mrb[0].mxu0
        %v993 = vadd.f32 0.0, %v992
        %v994 = vpop.f32.mrb[0].mxu0
        %v995 = vpop.f32.mrb[0].mxu0
        %v996 = vpop.f32.mrb[0].mxu0
        %997 = vdwg.mxu0
        %v998 = vsel %vm832, %v993, -1e+20
        %v999 = vsel %vm884, %v998, -inf
        %1000 = vmax.xlane.f32.xlu0 %v999
        %v1001 = vpop.xlane.xlu0 %1000
        %v1002 = vsub.f32 %v998, %v1001
        %v1003 = vmul.f32 %v1002, 1.442695
        %v1004 = vpow.pop %v1003
        %v1005 = vsel %vm884, %v1004, 0.0
        %1006 = vadd.xlane.f32.xlu0 %v1005
        %v1007 = vpop.xlane.xlu0 %1006
        %v1008 = vrcp.pop %v1007
        %v1009 = vmul.f32 %v1004, %v1008
        %v1010 = vpack.c.bf16 %v1009, %v1009
        %1011 = vrot.lane.b32.xlu0 %v830, 48
        %v1012 = vpop.permute.xlu0 %1011
        %v1014 = vsel %vm884, %v1010, 0
        %v1017 = vsel %vm902, %v1012, 0
        %1019 = vmatprep.subr.bf16.mxu0 0
        %1020 = vmatpush1.bf16.msra.mxu0 %v1017
        %1021 = vmatprep.subr.bf16.mxu0 0
        %1022 = vmatpush1.bf16.msra.mxu0 0
        %1023 = vmatprep.subr.bf16.mxu0 0
        %1024 = vmatpush1.bf16.msra.mxu0 0
        %1025 = vmatprep.subr.bf16.mxu0 0
        %1026 = vmatpush1.bf16.msra.mxu0 0
        %1027 = vmatprep.subr.bf16.mxu0 0
        %1028 = vmatpush1.bf16.msra.mxu0 0
        %1029 = vmatprep.subr.bf16.mxu0 0
        %1030 = vmatpush1.bf16.msra.mxu0 0
        %1031 = vmatprep.subr.bf16.mxu0 0
        %1032 = vmatpush1.bf16.msra.mxu0 0
        %1033 = vmatprep.subr.bf16.mxu0 0
        %1034 = vmatpush1.bf16.msra.mxu0 0
        %1035 = vmatprep.subr.bf16.mxu0 0
        %1036 = vmatpush1.bf16.msra.mxu0 0
        %1037 = vmatprep.subr.bf16.mxu0 0
        %1038 = vmatpush1.bf16.msra.mxu0 0
        %1039 = vmatprep.subr.bf16.mxu0 0
        %1040 = vmatpush1.bf16.msra.mxu0 0
        %1041 = vmatprep.subr.bf16.mxu0 0
        %1042 = vmatpush1.bf16.msra.mxu0 0
        %1043 = vmatprep.subr.bf16.mxu0 0
        %1044 = vmatpush1.bf16.msra.mxu0 0
        %1045 = vmatprep.subr.bf16.mxu0 0
        %1046 = vmatpush1.bf16.msra.mxu0 0
        %1047 = vmatprep.subr.bf16.mxu0 0
        %1048 = vmatpush1.bf16.msra.mxu0 0
        %1049 = vmatprep.subr.bf16.mxu0 0
        %1050 = vmatpush1.bf16.msra.mxu0 0
        %1051 = vmatprep.mubr.bf16.mxu0 0
        %1052 = vmatmul.mubr.bf16.gmra.mrb[0].mxu0 %v1014
        %v1053 = vpop.f32.mrb[0].mxu0
        %v1054 = vadd.f32 0.0, %v1053
        %v1055 = vpop.f32.mrb[0].mxu0
        %v1056 = vpop.f32.mrb[0].mxu0
        %v1057 = vpop.f32.mrb[0].mxu0
        %1058 = vdwg.mxu0
        %1060 = vrot.lane.b32.xlu0 %v1054, 16
        %v1061 = vpop.permute.xlu0 %1060
        %vm1063 = vcmask 261248
        %1064 = vst.msk [vmem:[#allocation3] sm:$0xff] %vm1063, %v1061
        %v1065 = vld [vmem:[#allocation3] sm:$0xff]
        %v1066 = vpack.c.bf16 %v1065, %v1065
        %v1067 = vld [vmem:[%s728] sm:$0xf]
        %v1068 = vld [vmem:[%s728 + $0x4] sm:$0xf]
        %v1069 = vld [vmem:[%s728 + $0x8] sm:$0xf]
        %v1070 = vld [vmem:[%s728 + $0xc] sm:$0xf]
        %v1071 = vld [vmem:[%s731] sm:$0x1]
        %v1073 = vlaneseq
        %v1074 = vshrl.u32 %v1073, 7
        %v1075 = vsub.s32 0, %v1074
        %v1076 = vrot.slane %v1071, %v1075
        %v1082 = vunpack.c.l.b16 %v1067
        %v1083 = vunpack.c.l.b16 %v1068
        %v1084 = vunpack.c.l.b16 %v1069
        %v1085 = vunpack.c.l.b16 %v1070
        %v1086 = vpack.c.b16 %v1083, %v1082
        %v1087 = vpack.c.b16 %v1085, %v1084
        %v1091 = vsel %vm784, %v1066, 0
        %1093 = vmatprep.subr.bf16.mxu0 0
        %1094 = vmatpush1.bf16.msra.mxu0 %v1086
        %1095 = vmatprep.subr.bf16.mxu0 0
        %1096 = vmatpush1.bf16.msra.mxu0 %v1087
        %1097 = vmatprep.subr.bf16.mxu0 0
        %1098 = vmatpush1.bf16.msra.mxu0 0
        %1099 = vmatprep.subr.bf16.mxu0 0
        %1100 = vmatpush1.bf16.msra.mxu0 0
        %1101 = vmatprep.subr.bf16.mxu0 0
        %1102 = vmatpush1.bf16.msra.mxu0 0
        %1103 = vmatprep.subr.bf16.mxu0 0
        %1104 = vmatpush1.bf16.msra.mxu0 0
        %1105 = vmatprep.subr.bf16.mxu0 0
        %1106 = vmatpush1.bf16.msra.mxu0 0
        %1107 = vmatprep.subr.bf16.mxu0 0
        %1108 = vmatpush1.bf16.msra.mxu0 0
        %1109 = vmatprep.subr.bf16.mxu0 0
        %1110 = vmatpush1.bf16.msra.mxu0 0
        %1111 = vmatprep.subr.bf16.mxu0 0
        %1112 = vmatpush1.bf16.msra.mxu0 0
        %1113 = vmatprep.subr.bf16.mxu0 0
        %1114 = vmatpush1.bf16.msra.mxu0 0
        %1115 = vmatprep.subr.bf16.mxu0 0
        %1116 = vmatpush1.bf16.msra.mxu0 0
        %1117 = vmatprep.subr.bf16.mxu0 0
        %1118 = vmatpush1.bf16.msra.mxu0 0
        %1119 = vmatprep.subr.bf16.mxu0 0
        %1120 = vmatpush1.bf16.msra.mxu0 0
        %1121 = vmatprep.subr.bf16.mxu0 0
        %1122 = vmatpush1.bf16.msra.mxu0 0
        %1123 = vmatprep.subr.bf16.mxu0 0
        %1124 = vmatpush1.bf16.msra.mxu0 0
        %1125 = vmatprep.mubr.bf16.mxu0 0
        %1126 = vmatmul.mubr.bf16.gmra.mrb[0].mxu0 %v1091
        %v1127 = vpop.f32.mrb[0].mxu0
        %v1128 = vadd.f32 %v1076, %v1127
        %v1129 = vpop.f32.mrb[0].mxu0
        %v1130 = vpop.f32.mrb[0].mxu0
        %v1131 = vpop.f32.mrb[0].mxu0
        %1132 = vdwg.mxu0
        %v1133 = vadd.f32 %v1128, %v759
        %v1134 = vld [vmem:[%s608] sm:$0x1]
        %v1135 = vld [vmem:[%s616] sm:$0x1]
        %v1136 = vsel %vm784, %v1133, 0.0
        %1137 = vadd.xlane.f32.xlu0 %v1136
        %v1138 = vpop.xlane.xlu0 %1137
        %v1139 = vrcp.pop 32.0
        %v1140 = vmul.f32 %v1138, %v1139
        %v1141 = vsub.f32 %v1133, %v1140
        %v1142 = vmul.f32 %v1141, %v1141
        %v1143 = vsel %vm784, %v1142, 0.0
        %1144 = vadd.xlane.f32.xlu0 %v1143
        %v1145 = vpop.xlane.xlu0 %1144
        %v1146 = vmul.f32 %v1145, %v1139
        %v1147 = vadd.f32 %v1146, 1e-05
        %v1148 = vrsqrt.pop %v1147
        %v1149 = vmul.f32 %v1141, %v1148
        %v1151 = vlaneseq
        %v1152 = vshrl.u32 %v1151, 7
        %v1153 = vsub.s32 0, %v1152
        %v1154 = vrot.slane %v1134, %v1153
        %v1156 = vmul.f32 %v1149, %v1154
        %v1158 = vlaneseq
        %v1159 = vshrl.u32 %v1158, 7
        %v1160 = vsub.s32 0, %v1159
        %v1161 = vrot.slane %v1135, %v1160
        %v1163 = vadd.f32 %v1156, %v1161
        %v1164 = vpack.c.bf16 %v1163, %v1163
        %v1165 = vld [vmem:[%s736] sm:$0xf]
        %v1166 = vld [vmem:[%s736 + $0x4] sm:$0xf]
        %v1167 = vld [vmem:[%s736 + $0x8] sm:$0xf]
        %v1168 = vld [vmem:[%s736 + $0xc] sm:$0xf]
        %v1169 = vld [vmem:[%s624] sm:$0x1]
        %v1171 = vlaneseq
        %v1172 = vshrl.u32 %v1171, 7
        %v1173 = vsub.s32 0, %v1172
        %v1174 = vrot.slane %v1169, %v1173
        %v1180 = vunpack.c.l.b16 %v1165
        %v1181 = vunpack.c.l.b16 %v1166
        %v1182 = vunpack.c.l.b16 %v1167
        %v1183 = vunpack.c.l.b16 %v1168
        %v1184 = vpack.c.b16 %v1181, %v1180
        %v1185 = vpack.c.b16 %v1183, %v1182
        %v1189 = vsel %vm784, %v1164, 0
        %1191 = vmatprep.subr.bf16.mxu0 0
        %1192 = vmatpush1.bf16.msra.mxu0 %v1184
        %1193 = vmatprep.subr.bf16.mxu0 0
        %1194 = vmatpush1.bf16.msra.mxu0 %v1185
        %1195 = vmatprep.subr.bf16.mxu0 0
        %1196 = vmatpush1.bf16.msra.mxu0 0
        %1197 = vmatprep.subr.bf16.mxu0 0
        %1198 = vmatpush1.bf16.msra.mxu0 0
        %1199 = vmatprep.subr.bf16.mxu0 0
        %1200 = vmatpush1.bf16.msra.mxu0 0
        %1201 = vmatprep.subr.bf16.mxu0 0
        %1202 = vmatpush1.bf16.msra.mxu0 0
        %1203 = vmatprep.subr.bf16.mxu0 0
        %1204 = vmatpush1.bf16.msra.mxu0 0
        %1205 = vmatprep.subr.bf16.mxu0 0
        %1206 = vmatpush1.bf16.msra.mxu0 0
        %1207 = vmatprep.subr.bf16.mxu0 0
        %1208 = vmatpush1.bf16.msra.mxu0 0
        %1209 = vmatprep.subr.bf16.mxu0 0
        %1210 = vmatpush1.bf16.msra.mxu0 0
        %1211 = vmatprep.subr.bf16.mxu0 0
        %1212 = vmatpush1.bf16.msra.mxu0 0
        %1213 = vmatprep.subr.bf16.mxu0 0
        %1214 = vmatpush1.bf16.msra.mxu0 0
        %1215 = vmatprep.subr.bf16.mxu0 0
        %1216 = vmatpush1.bf16.msra.mxu0 0
        %1217 = vmatprep.subr.bf16.mxu0 0
        %1218 = vmatpush1.bf16.msra.mxu0 0
        %1219 = vmatprep.subr.bf16.mxu0 0
        %1220 = vmatpush1.bf16.msra.mxu0 0
        %1221 = vmatprep.subr.bf16.mxu0 0
        %1222 = vmatpush1.bf16.msra.mxu0 0
        %1223 = vmatprep.mubr.bf16.mxu0 0
        %1224 = vmatmul.mubr.bf16.gmra.mrb[0].mxu0 %v1189
        %v1225 = vpop.f32.mrb[0].mxu0
        %v1226 = vadd.f32 %v1174, %v1225
        %v1227 = vpop.f32.mrb[0].mxu0
        %v1228 = vpop.f32.mrb[0].mxu0
        %v1229 = vpop.f32.mrb[0].mxu0
        %1230 = vdwg.mxu0
        %v1231 = vmax.f32 %v1226, 0.0
        %v1232 = vpack.c.bf16 %v1231, %v1231
        %v1233 = vld [vmem:[%s741] sm:$0xf]
        %v1234 = vld [vmem:[%s741 + $0x4] sm:$0xf]
        %v1235 = vld [vmem:[%s741 + $0x8] sm:$0xf]
        %v1236 = vld [vmem:[%s741 + $0xc] sm:$0xf]
        %v1237 = vld [vmem:[%s741 + $0x10] sm:$0xf]
        %v1238 = vld [vmem:[%s741 + $0x14] sm:$0xf]
        %v1239 = vld [vmem:[%s741 + $0x18] sm:$0xf]
        %v1240 = vld [vmem:[%s741 + $0x1c] sm:$0xf]
        %v1241 = vld [vmem:[%s744] sm:$0x1]
        %v1243 = vlaneseq
        %v1244 = vshrl.u32 %v1243, 7
        %v1245 = vsub.s32 0, %v1244
        %v1246 = vrot.slane %v1241, %v1245
        %v1256 = vunpack.c.l.b16 %v1233
        %v1257 = vunpack.c.l.b16 %v1234
        %v1258 = vunpack.c.l.b16 %v1235
        %v1259 = vunpack.c.l.b16 %v1236
        %v1260 = vunpack.c.l.b16 %v1237
        %v1261 = vunpack.c.l.b16 %v1238
        %v1262 = vunpack.c.l.b16 %v1239
        %v1263 = vunpack.c.l.b16 %v1240
        %v1264 = vpack.c.b16 %v1257, %v1256
        %v1265 = vpack.c.b16 %v1259, %v1258
        %v1266 = vpack.c.b16 %v1261, %v1260
        %v1267 = vpack.c.b16 %v1263, %v1262
        %vm1272 = vcmask 523264
        %v1274 = vsel %vm1272, %v1232, 0
        %1276 = vmatprep.subr.bf16.mxu0 0
        %1277 = vmatpush1.bf16.msra.mxu0 %v1264
        %1278 = vmatprep.subr.bf16.mxu0 0
        %1279 = vmatpush1.bf16.msra.mxu0 %v1265
        %1280 = vmatprep.subr.bf16.mxu0 0
        %1281 = vmatpush1.bf16.msra.mxu0 %v1266
        %1282 = vmatprep.subr.bf16.mxu0 0
        %1283 = vmatpush1.bf16.msra.mxu0 %v1267
        %1284 = vmatprep.subr.bf16.mxu0 0
        %1285 = vmatpush1.bf16.msra.mxu0 0
        %1286 = vmatprep.subr.bf16.mxu0 0
        %1287 = vmatpush1.bf16.msra.mxu0 0
        %1288 = vmatprep.subr.bf16.mxu0 0
        %1289 = vmatpush1.bf16.msra.mxu0 0
        %1290 = vmatprep.subr.bf16.mxu0 0
        %1291 = vmatpush1.bf16.msra.mxu0 0
        %1292 = vmatprep.subr.bf16.mxu0 0
        %1293 = vmatpush1.bf16.msra.mxu0 0
        %1294 = vmatprep.subr.bf16.mxu0 0
        %1295 = vmatpush1.bf16.msra.mxu0 0
        %1296 = vmatprep.subr.bf16.mxu0 0
        %1297 = vmatpush1.bf16.msra.mxu0 0
        %1298 = vmatprep.subr.bf16.mxu0 0
        %1299 = vmatpush1.bf16.msra.mxu0 0
        %1300 = vmatprep.subr.bf16.mxu0 0
        %1301 = vmatpush1.bf16.msra.mxu0 0
        %1302 = vmatprep.subr.bf16.mxu0 0
        %1303 = vmatpush1.bf16.msra.mxu0 0
        %1304 = vmatprep.subr.bf16.mxu0 0
        %1305 = vmatpush1.bf16.msra.mxu0 0
        %1306 = vmatprep.subr.bf16.mxu0 0
        %1307 = vmatpush1.bf16.msra.mxu0 0
        %1308 = vmatprep.mubr.bf16.mxu0 0
        %1309 = vmatmul.mubr.bf16.gmra.mrb[0].mxu0 %v1274
        %v1310 = vpop.f32.mrb[0].mxu0
        %v1311 = vadd.f32 %v1246, %v1310
        %v1312 = vpop.f32.mrb[0].mxu0
        %v1313 = vpop.f32.mrb[0].mxu0
        %v1314 = vpop.f32.mrb[0].mxu0
        %1315 = vdwg.mxu0
        %v1316 = vadd.f32 %v1163, %v1311
        %v1317 = vld [vmem:[%s747] sm:$0x1]
        %v1318 = vld [vmem:[%s750] sm:$0x1]
        %v1319 = vsel %vm784, %v1316, 0.0
        %1320 = vadd.xlane.f32.xlu0 %v1319
        %v1321 = vpop.xlane.xlu0 %1320
        %v1322 = vmul.f32 %v1321, %v1139
        %v1323 = vsub.f32 %v1316, %v1322
        %v1324 = vmul.f32 %v1323, %v1323
        %v1325 = vsel %vm784, %v1324, 0.0
        %1326 = vadd.xlane.f32.xlu0 %v1325
        %v1327 = vpop.xlane.xlu0 %1326
        %v1328 = vmul.f32 %v1327, %v1139
        %v1329 = vadd.f32 %v1328, 1e-05
        %v1330 = vrsqrt.pop %v1329
        %v1331 = vmul.f32 %v1323, %v1330
        %v1333 = vlaneseq
        %v1334 = vshrl.u32 %v1333, 7
        %v1335 = vsub.s32 0, %v1334
        %v1336 = vrot.slane %v1317, %v1335
        %v1338 = vmul.f32 %v1331, %v1336
        %v1340 = vlaneseq
        %v1341 = vshrl.u32 %v1340, 7
        %v1342 = vsub.s32 0, %v1341
        %v1343 = vrot.slane %v1318, %v1342
        %v1345 = vadd.f32 %v1338, %v1343
        %1346 = vst.msk [vmem:[#allocation2] sm:$0xff] %vm784, %v1345
        %p1347 = scmp.eq.s32.totalorder %s37, 1
        // Predicated region
        $region101: #{tpu_custom_call.1} parent=75 // pred_check
          %p1348 = pneg %p1347
        $region102: #{tpu_custom_call.1} parent=75 // pred_check_branch
          %1350 = sbr.rel (%p1348) target = $region104
        $region103: #{tpu_custom_call.1} parent=75 // pred_region
          %1351 = vst.msk [vmem:[%s715] sm:$0xff] %vm784, %v1345
        $region104: #{tpu_custom_call.1} parent=75 // pred_fallthru
          _
        %s1352 = sand.u32 %s411, 1
        %s1353 = scalar_lea.sflag [#allocation6], %s1352
        %s1354 = sand.u32 %s411, 1
        %s1355 = smul.addr %s1354, 8
        %s1356 = scalar_lea.vmem [#allocation12], %s1355
        // Predicated region
        $region105: #{tpu_custom_call.1} parent=75 // pred_check
          %p1357 = pneg %p421
        $region106: #{tpu_custom_call.1} parent=75 // pred_check_branch
          %1359 = sbr.rel (%p1357) target = $region108
        $region107: #{tpu_custom_call.1} parent=75 // pred_region
          %s1361 = ssub.s32 128, 128
          %1362 = vsyncadd %s1353, %s1361
          %s1363 = smul.addr %s36, 128
          %s1364 = scalar_lea.hbm %s14, %s1363
          %s1366 = sshll.u32 %s1356, 4
          %s1367 = int_to_ptr.vmem [resolvable:$true] %s1366
          %1369 = dma.vmem_to_hbm [thread:$0]  %s1367, 128, %s1364, %s1353
        $region108: #{tpu_custom_call.1} parent=75 // pred_fallthru
          _
      $region76: #{tpu_custom_call.1} parent=5 // pred_fallthru
        _
      %p1370 = scmp.le.s32.totalorder 2, %s27
      // Predicated region
      $region109: #{tpu_custom_call.1} parent=5 // pred_check
        %p1371 = pneg %p1370
      $region110: #{tpu_custom_call.1} parent=5 // pred_check_branch
        %1373 = sbr.rel (%p1371) target = $region112
      $region111: #{tpu_custom_call.1} parent=5 // pred_region
        %s1374 = ssub.s32 %s27, 2
        // Predicated region
        $region113: #{tpu_custom_call.1} parent=111 // pred_check
          %p1375 = pneg %p427
        $region114: #{tpu_custom_call.1} parent=111 // pred_check_branch
          %1377 = sbr.rel (%p1375) target = $region116
        $region115: #{tpu_custom_call.1} parent=111 // pred_region
          %s1378 = sand.u32 %s412, 1
          %s1379 = scalar_lea.sflag [#allocation6], %s1378
          %s1380 = sand.u32 %s412, 1
          %s1381 = smul.addr %s1380, 8
          %s1382 = scalar_lea.vmem [#allocation12], %s1381
          %1383 = dma.done %s1379, 128
        $region116: #{tpu_custom_call.1} parent=111 // pred_fallthru
          _
      $region112: #{tpu_custom_call.1} parent=5 // pred_fallthru
        _
    $region6: #{tpu_custom_call.1} parent=1 // loop_footer
      %s31 = sadd.s32 1, %s27
    $region7: #{tpu_custom_call.1} parent=1 // loop_footer_branch
      %26 = sbr.rel target = $region3
    $region8: #{tpu_custom_call.1} parent=1 // loop_exit
      _
    %1384 = vsyncpa [#allocation5], 1
    %s1385 = scalar_lea.sflag [#allocation5], 1
    %1386 = vsyncpa %s1385, 1
    %1387 = vsyncpa [#allocation8], 1
    %1388 = vsyncpa [#allocation6], 1
    %s1389 = scalar_lea.sflag [#allocation6], 1
    %1390 = vsyncpa %s1389, 1

</llo_original>
